<compile_context>
chip_gen: v7x
topology: tpu7x:2x2x1
jax: 0.10.0
libtpu: 0.0.40
codegen_flags: <defaults>
</compile_context>

<pallas_src>
import jax
import jax.numpy as jnp
from jax.experimental import pallas as pl
from jax.experimental.pallas import tpu as pltpu


LANE = 128  # pad all feature dims to the 128-lane vreg width


def _round_up(n, m):
    return ((n + m - 1) // m) * m


def _pick_tb(batch):
    """Pick a batch-tile size: as large as reasonable (amortize per-step
    overhead) while keeping >=2 grid points when there is enough work so the
    'parallel' axis can be sharded across TensorCores."""
    b8 = _round_up(batch, 8)           # f32 sublane multiple
    if b8 <= 128:
        return b8                       # single step covering the whole batch
    for tb in (512, 256, 128):
        if b8 >= 2 * tb:
            return tb
    return 128


def _mlp5_kernel(x_ref,
                 w1_ref, b1_ref, w2_ref, b2_ref, w3_ref, b3_ref,
                 w4_ref, b4_ref, w5_ref, b5_ref, w6_ref, b6_ref,
                 out_ref, hid4_ref):
    """One batch tile through all 6 (padded, lane-dense) Linear layers."""

    def dense_relu(h, w_ref, b_ref):
        y = jnp.dot(h, w_ref[...], preferred_element_type=jnp.float32)
        return jnp.maximum(y + b_ref[...], 0.0)   # bias/ReLU on f32 accumulator

    h = x_ref[...].astype(jnp.float32)
    h = dense_relu(h, w1_ref, b1_ref)             # hidden1
    h = dense_relu(h, w2_ref, b2_ref)             # hidden2 (dropout = identity)
    h = dense_relu(h, w3_ref, b3_ref)             # hidden3
    h = dense_relu(h, w4_ref, b4_ref)             # hidden4
    hid4_ref[...] = h.astype(hid4_ref.dtype)      # second return value
    h = dense_relu(h, w5_ref, b5_ref)             # hidden5
    o = jnp.dot(h, w6_ref[...], preferred_element_type=jnp.float32) + b6_ref[...]
    out_ref[...] = o.astype(out_ref.dtype)        # relu_out = False


def objective_estimator_forward(x, params, *, tb=None):
    """x: (B, In); params: list of 6 (w, b) with w pre-transposed to (in, out)."""
    B, In = x.shape
    assert len(params) == 6
    dims = [In] + [w.shape[1] for (w, _) in params]          # In, H1..H5, O
    padded = [_round_up(d, LANE) for d in dims]

    if tb is None:
        tb = _pick_tb(B)
    Bp = _round_up(B, tb)

    # --- zero-pad input and parameters once, outside the hot path -----------
    x_p = jnp.zeros((Bp, padded[0]), x.dtype).at[:B, :In].set(x)

    padded_args = []
    in_specs = [pl.BlockSpec((tb, padded[0]), lambda i: (i, 0))]
    for li, (w, b) in enumerate(params):
        ip, op = padded[li], padded[li + 1]
        w_p = jnp.zeros((ip, op), w.dtype).at[:w.shape[0], :w.shape[1]].set(w)
        b_p = jnp.zeros((1, op), b.dtype).at[0, :b.shape[0]].set(b)
        padded_args.extend([w_p, b_p])
        # weights & biases: constant index map -> VMEM-resident across grid
        in_specs.append(pl.BlockSpec((ip, op), lambda i: (0, 0)))
        in_specs.append(pl.BlockSpec((1, op), lambda i: (0, 0)))

    H4, O = dims[4], dims[6]
    H4p, Op = padded[4], padded[6]

    out_shapes = (
        jax.ShapeDtypeStruct((Bp, Op), x.dtype),    # output (lane-dense, padded)
        jax.ShapeDtypeStruct((Bp, H4p), x.dtype),   # hidden4 (lane-dense, padded)
    )
    out_specs = [
        pl.BlockSpec((tb, Op), lambda i: (i, 0)),
        pl.BlockSpec((tb, H4p), lambda i: (i, 0)),
    ]

    grid_spec = pltpu.PrefetchScalarGridSpec(
        num_scalar_prefetch=0,
        grid=(Bp // tb,),
        in_specs=in_specs,
        out_specs=out_specs,
    )

    out_p, hid4_p = pl.pallas_call(
        _mlp5_kernel,
        out_shape=out_shapes,
        grid_spec=grid_spec,
        compiler_params=pltpu.CompilerParams(
            dimension_semantics=("parallel",),     # batch axis: pipeline + megacore
            vmem_limit_bytes=64 * 1024 * 1024,     # fits v7x's 64 MiB VMEM
        ),
    )(x_p, *padded_args)

    # slice the padded, lane-dense outputs back to logical shapes
    return out_p[:B, :O], hid4_p[:B, :H4]


def init_params(key, input_size, hidden_sizes, output_size, dtype=jnp.float32):
    """Synthetic params mirroring torch.nn.Linear init; weights pre-transposed
    to (in_features, out_features) for the kernel's row-major matmuls."""
    sizes = [input_size] + list(hidden_sizes) + [output_size]
    params = []
    keys = jax.random.split(key, 2 * (len(sizes) - 1))
    for li in range(len(sizes) - 1):
        fan_in, fan_out = sizes[li], sizes[li + 1]
        bound = 1.0 / (fan_in ** 0.5)
        w = jax.random.uniform(keys[2 * li], (fan_in, fan_out), dtype, -bound, bound)
        b = jax.random.uniform(keys[2 * li + 1], (fan_out,), dtype, -bound, bound)
        params.append((w, b))
    return params


def _reference_forward(x, params):
    """Pure-JAX reference (dropout_ratio=0.0, relu_out=False)."""
    h = x
    hiddens = []
    for li, (w, b) in enumerate(params):
        pre = h @ w + b
        if li < 5:
            h = jnp.maximum(pre, 0.0)
            hiddens.append(h)
        else:
            out = pre
    return out, hiddens[3]   # (output, hidden4)


if __name__ == "__main__":
    # Small shapes consistent with the module's forward:
    #   input_size=32, hidden_sizes=[64, 96, 80, 48, 72], output_size=16
    # Batch 256 -> auto tile 128 -> 2 grid points (both v7x TensorCores work).
    batch = 256
    input_size = 32
    hidden_sizes = [64, 96, 80, 48, 72]
    output_size = 16

    key = jax.random.PRNGKey(0)
    kx, kp = jax.random.split(key)
    x = jax.random.normal(kx, (batch, input_size), dtype=jnp.float32)
    params = init_params(kp, input_size, hidden_sizes, output_size)

    out, hidden4 = objective_estimator_forward(x, params)
    jax.block_until_ready((out, hidden4))

    out_ref, hid4_ref = _reference_forward(x, params)
    assert out.shape == (batch, output_size)
    assert hidden4.shape == (batch, hidden_sizes[3])
    assert jnp.allclose(out, out_ref, atol=1e-4, rtol=1e-4)
    assert jnp.allclose(hidden4, hid4_ref, atol=1e-4, rtol=1e-4)

    print("KERNEL_OK")
</pallas_src>

<mosaic_0001>
module attributes {stable_mosaic.version = 11 : i64} {
  func.func @_mlp5_kernel(%arg0: i32, %arg1: memref<128x128xf32, #tpu.memory_space<vmem>>, %arg2: memref<128x128xf32, #tpu.memory_space<vmem>>, %arg3: memref<1x128xf32, #tpu.memory_space<vmem>>, %arg4: memref<128x128xf32, #tpu.memory_space<vmem>>, %arg5: memref<1x128xf32, #tpu.memory_space<vmem>>, %arg6: memref<128x128xf32, #tpu.memory_space<vmem>>, %arg7: memref<1x128xf32, #tpu.memory_space<vmem>>, %arg8: memref<128x128xf32, #tpu.memory_space<vmem>>, %arg9: memref<1x128xf32, #tpu.memory_space<vmem>>, %arg10: memref<128x128xf32, #tpu.memory_space<vmem>>, %arg11: memref<1x128xf32, #tpu.memory_space<vmem>>, %arg12: memref<128x128xf32, #tpu.memory_space<vmem>>, %arg13: memref<1x128xf32, #tpu.memory_space<vmem>>, %arg14: memref<128x128xf32, #tpu.memory_space<vmem>>, %arg15: memref<128x128xf32, #tpu.memory_space<vmem>>) attributes {dimension_semantics = [#tpu.dimension_semantics<parallel>], iteration_bounds = array<i64: 2>, scalar_prefetch = 0 : i64, scratch_operands = 0 : i64, tpu.core_type = #tpu.core_type<tc>, window_params = [{transform_indices = @transform_0, window_bounds = array<i64: 128, 128>}, {pipeline_mode = #tpu.pipeline_mode<synchronous>, transform_indices = @transform_1, window_bounds = array<i64: 128, 128>}, {pipeline_mode = #tpu.pipeline_mode<synchronous>, transform_indices = @transform_2, window_bounds = array<i64: 1, 128>}, {pipeline_mode = #tpu.pipeline_mode<synchronous>, transform_indices = @transform_3, window_bounds = array<i64: 128, 128>}, {pipeline_mode = #tpu.pipeline_mode<synchronous>, transform_indices = @transform_4, window_bounds = array<i64: 1, 128>}, {pipeline_mode = #tpu.pipeline_mode<synchronous>, transform_indices = @transform_5, window_bounds = array<i64: 128, 128>}, {pipeline_mode = #tpu.pipeline_mode<synchronous>, transform_indices = @transform_6, window_bounds = array<i64: 1, 128>}, {pipeline_mode = #tpu.pipeline_mode<synchronous>, transform_indices = @transform_7, window_bounds = array<i64: 128, 128>}, {pipeline_mode = #tpu.pipeline_mode<synchronous>, transform_indices = @transform_8, window_bounds = array<i64: 1, 128>}, {pipeline_mode = #tpu.pipeline_mode<synchronous>, transform_indices = @transform_9, window_bounds = array<i64: 128, 128>}, {pipeline_mode = #tpu.pipeline_mode<synchronous>, transform_indices = @transform_10, window_bounds = array<i64: 1, 128>}, {pipeline_mode = #tpu.pipeline_mode<synchronous>, transform_indices = @transform_11, window_bounds = array<i64: 128, 128>}, {pipeline_mode = #tpu.pipeline_mode<synchronous>, transform_indices = @transform_12, window_bounds = array<i64: 1, 128>}, {transform_indices = @transform_13, window_bounds = array<i64: 128, 128>}, {transform_indices = @transform_14, window_bounds = array<i64: 128, 128>}]} {
    %c0 = arith.constant 0 : index
    %c0_0 = arith.constant 0 : index
    %0 = vector.load %arg1[%c0, %c0_0] : memref<128x128xf32, #tpu.memory_space<vmem>>, vector<128x128xf32>
    %c0_1 = arith.constant 0 : index
    %c0_2 = arith.constant 0 : index
    %1 = vector.load %arg2[%c0_1, %c0_2] : memref<128x128xf32, #tpu.memory_space<vmem>>, vector<128x128xf32>
    %cst = arith.constant dense<0.000000e+00> : vector<128x128xf32>
    %2 = tpu.matmul %0, %1, %cst {dimension_numbers = #tpu.dot_dimension_numbers<[1], [0], [0], [1], [0, 0, 1, 1], [], []>} : vector<128x128xf32>, vector<128x128xf32>, vector<128x128xf32> -> vector<128x128xf32>
    %c0_3 = arith.constant 0 : index
    %c0_4 = arith.constant 0 : index
    %3 = vector.load %arg3[%c0_3, %c0_4] : memref<1x128xf32, #tpu.memory_space<vmem>>, vector<1x128xf32>
    %4 = vector.broadcast %3 : vector<1x128xf32> to vector<128x128xf32>
    %5 = arith.addf %2, %4 : vector<128x128xf32>
    %cst_5 = arith.constant 0.000000e+00 : f32
    %6 = vector.broadcast %cst_5 : f32 to vector<128x128xf32>
    %7 = arith.maximumf %5, %6 : vector<128x128xf32>
    %c0_6 = arith.constant 0 : index
    %c0_7 = arith.constant 0 : index
    %8 = vector.load %arg4[%c0_6, %c0_7] : memref<128x128xf32, #tpu.memory_space<vmem>>, vector<128x128xf32>
    %cst_8 = arith.constant dense<0.000000e+00> : vector<128x128xf32>
    %9 = tpu.matmul %7, %8, %cst_8 {dimension_numbers = #tpu.dot_dimension_numbers<[1], [0], [0], [1], [0, 0, 1, 1], [], []>} : vector<128x128xf32>, vector<128x128xf32>, vector<128x128xf32> -> vector<128x128xf32>
    %c0_9 = arith.constant 0 : index
    %c0_10 = arith.constant 0 : index
    %10 = vector.load %arg5[%c0_9, %c0_10] : memref<1x128xf32, #tpu.memory_space<vmem>>, vector<1x128xf32>
    %11 = vector.broadcast %10 : vector<1x128xf32> to vector<128x128xf32>
    %12 = arith.addf %9, %11 : vector<128x128xf32>
    %cst_11 = arith.constant 0.000000e+00 : f32
    %13 = vector.broadcast %cst_11 : f32 to vector<128x128xf32>
    %14 = arith.maximumf %12, %13 : vector<128x128xf32>
    %c0_12 = arith.constant 0 : index
    %c0_13 = arith.constant 0 : index
    %15 = vector.load %arg6[%c0_12, %c0_13] : memref<128x128xf32, #tpu.memory_space<vmem>>, vector<128x128xf32>
    %cst_14 = arith.constant dense<0.000000e+00> : vector<128x128xf32>
    %16 = tpu.matmul %14, %15, %cst_14 {dimension_numbers = #tpu.dot_dimension_numbers<[1], [0], [0], [1], [0, 0, 1, 1], [], []>} : vector<128x128xf32>, vector<128x128xf32>, vector<128x128xf32> -> vector<128x128xf32>
    %c0_15 = arith.constant 0 : index
    %c0_16 = arith.constant 0 : index
    %17 = vector.load %arg7[%c0_15, %c0_16] : memref<1x128xf32, #tpu.memory_space<vmem>>, vector<1x128xf32>
    %18 = vector.broadcast %17 : vector<1x128xf32> to vector<128x128xf32>
    %19 = arith.addf %16, %18 : vector<128x128xf32>
    %cst_17 = arith.constant 0.000000e+00 : f32
    %20 = vector.broadcast %cst_17 : f32 to vector<128x128xf32>
    %21 = arith.maximumf %19, %20 : vector<128x128xf32>
    %c0_18 = arith.constant 0 : index
    %c0_19 = arith.constant 0 : index
    %22 = vector.load %arg8[%c0_18, %c0_19] : memref<128x128xf32, #tpu.memory_space<vmem>>, vector<128x128xf32>
    %cst_20 = arith.constant dense<0.000000e+00> : vector<128x128xf32>
    %23 = tpu.matmul %21, %22, %cst_20 {dimension_numbers = #tpu.dot_dimension_numbers<[1], [0], [0], [1], [0, 0, 1, 1], [], []>} : vector<128x128xf32>, vector<128x128xf32>, vector<128x128xf32> -> vector<128x128xf32>
    %c0_21 = arith.constant 0 : index
    %c0_22 = arith.constant 0 : index
    %24 = vector.load %arg9[%c0_21, %c0_22] : memref<1x128xf32, #tpu.memory_space<vmem>>, vector<1x128xf32>
    %25 = vector.broadcast %24 : vector<1x128xf32> to vector<128x128xf32>
    %26 = arith.addf %23, %25 : vector<128x128xf32>
    %cst_23 = arith.constant 0.000000e+00 : f32
    %27 = vector.broadcast %cst_23 : f32 to vector<128x128xf32>
    %28 = arith.maximumf %26, %27 : vector<128x128xf32>
    %c0_24 = arith.constant 0 : index
    %c0_25 = arith.constant 0 : index
    %29 = vector.load %arg15[%c0_24, %c0_25] : memref<128x128xf32, #tpu.memory_space<vmem>>, vector<128x128xf32>
    tpu.vector_store %arg15[%c0_24, %c0_25], %28 {strides = array<i32>} : memref<128x128xf32, #tpu.memory_space<vmem>>, vector<128x128xf32>,
    %c0_26 = arith.constant 0 : index
    %c0_27 = arith.constant 0 : index
    %30 = vector.load %arg10[%c0_26, %c0_27] : memref<128x128xf32, #tpu.memory_space<vmem>>, vector<128x128xf32>
    %cst_28 = arith.constant dense<0.000000e+00> : vector<128x128xf32>
    %31 = tpu.matmul %28, %30, %cst_28 {dimension_numbers = #tpu.dot_dimension_numbers<[1], [0], [0], [1], [0, 0, 1, 1], [], []>} : vector<128x128xf32>, vector<128x128xf32>, vector<128x128xf32> -> vector<128x128xf32>
    %c0_29 = arith.constant 0 : index
    %c0_30 = arith.constant 0 : index
    %32 = vector.load %arg11[%c0_29, %c0_30] : memref<1x128xf32, #tpu.memory_space<vmem>>, vector<1x128xf32>
    %33 = vector.broadcast %32 : vector<1x128xf32> to vector<128x128xf32>
    %34 = arith.addf %31, %33 : vector<128x128xf32>
    %cst_31 = arith.constant 0.000000e+00 : f32
    %35 = vector.broadcast %cst_31 : f32 to vector<128x128xf32>
    %36 = arith.maximumf %34, %35 : vector<128x128xf32>
    %c0_32 = arith.constant 0 : index
    %c0_33 = arith.constant 0 : index
    %37 = vector.load %arg12[%c0_32, %c0_33] : memref<128x128xf32, #tpu.memory_space<vmem>>, vector<128x128xf32>
    %cst_34 = arith.constant dense<0.000000e+00> : vector<128x128xf32>
    %38 = tpu.matmul %36, %37, %cst_34 {dimension_numbers = #tpu.dot_dimension_numbers<[1], [0], [0], [1], [0, 0, 1, 1], [], []>} : vector<128x128xf32>, vector<128x128xf32>, vector<128x128xf32> -> vector<128x128xf32>
    %c0_35 = arith.constant 0 : index
    %c0_36 = arith.constant 0 : index
    %39 = vector.load %arg13[%c0_35, %c0_36] : memref<1x128xf32, #tpu.memory_space<vmem>>, vector<1x128xf32>
    %40 = vector.broadcast %39 : vector<1x128xf32> to vector<128x128xf32>
    %41 = arith.addf %38, %40 : vector<128x128xf32>
    %c0_37 = arith.constant 0 : index
    %c0_38 = arith.constant 0 : index
    %42 = vector.load %arg14[%c0_37, %c0_38] : memref<128x128xf32, #tpu.memory_space<vmem>>, vector<128x128xf32>
    tpu.vector_store %arg14[%c0_37, %c0_38], %41 {strides = array<i32>} : memref<128x128xf32, #tpu.memory_space<vmem>>, vector<128x128xf32>,
    return
  }
  func.func @transform_0(%arg0: i32) -> (i32, i32) {
    %c0_i32 = arith.constant 0 : i32
    %c0_i32_0 = arith.constant 0 : i32
    return %arg0, %c0_i32 : i32, i32
  }
  func.func @transform_1(%arg0: i32) -> (i32, i32) {
    %c0_i32 = arith.constant 0 : i32
    %c0_i32_0 = arith.constant 0 : i32
    %c0_i32_1 = arith.constant 0 : i32
    return %c0_i32, %c0_i32_0 : i32, i32
  }
  func.func @transform_2(%arg0: i32) -> (i32, i32) {
    %c0_i32 = arith.constant 0 : i32
    %c0_i32_0 = arith.constant 0 : i32
    %c0_i32_1 = arith.constant 0 : i32
    return %c0_i32, %c0_i32_0 : i32, i32
  }
  func.func @transform_3(%arg0: i32) -> (i32, i32) {
    %c0_i32 = arith.constant 0 : i32
    %c0_i32_0 = arith.constant 0 : i32
    %c0_i32_1 = arith.constant 0 : i32
    return %c0_i32, %c0_i32_0 : i32, i32
  }
  func.func @transform_4(%arg0: i32) -> (i32, i32) {
    %c0_i32 = arith.constant 0 : i32
    %c0_i32_0 = arith.constant 0 : i32
    %c0_i32_1 = arith.constant 0 : i32
    return %c0_i32, %c0_i32_0 : i32, i32
  }
  func.func @transform_5(%arg0: i32) -> (i32, i32) {
    %c0_i32 = arith.constant 0 : i32
    %c0_i32_0 = arith.constant 0 : i32
    %c0_i32_1 = arith.constant 0 : i32
    return %c0_i32, %c0_i32_0 : i32, i32
  }
  func.func @transform_6(%arg0: i32) -> (i32, i32) {
    %c0_i32 = arith.constant 0 : i32
    %c0_i32_0 = arith.constant 0 : i32
    %c0_i32_1 = arith.constant 0 : i32
    return %c0_i32, %c0_i32_0 : i32, i32
  }
  func.func @transform_7(%arg0: i32) -> (i32, i32) {
    %c0_i32 = arith.constant 0 : i32
    %c0_i32_0 = arith.constant 0 : i32
    %c0_i32_1 = arith.constant 0 : i32
    return %c0_i32, %c0_i32_0 : i32, i32
  }
  func.func @transform_8(%arg0: i32) -> (i32, i32) {
    %c0_i32 = arith.constant 0 : i32
    %c0_i32_0 = arith.constant 0 : i32
    %c0_i32_1 = arith.constant 0 : i32
    return %c0_i32, %c0_i32_0 : i32, i32
  }
  func.func @transform_9(%arg0: i32) -> (i32, i32) {
    %c0_i32 = arith.constant 0 : i32
    %c0_i32_0 = arith.constant 0 : i32
    %c0_i32_1 = arith.constant 0 : i32
    return %c0_i32, %c0_i32_0 : i32, i32
  }
  func.func @transform_10(%arg0: i32) -> (i32, i32) {
    %c0_i32 = arith.constant 0 : i32
    %c0_i32_0 = arith.constant 0 : i32
    %c0_i32_1 = arith.constant 0 : i32
    return %c0_i32, %c0_i32_0 : i32, i32
  }
  func.func @transform_11(%arg0: i32) -> (i32, i32) {
    %c0_i32 = arith.constant 0 : i32
    %c0_i32_0 = arith.constant 0 : i32
    %c0_i32_1 = arith.constant 0 : i32
    return %c0_i32, %c0_i32_0 : i32, i32
  }
  func.func @transform_12(%arg0: i32) -> (i32, i32) {
    %c0_i32 = arith.constant 0 : i32
    %c0_i32_0 = arith.constant 0 : i32
    %c0_i32_1 = arith.constant 0 : i32
    return %c0_i32, %c0_i32_0 : i32, i32
  }
  func.func @transform_13(%arg0: i32) -> (i32, i32) {
    %c0_i32 = arith.constant 0 : i32
    %c0_i32_0 = arith.constant 0 : i32
    return %arg0, %c0_i32 : i32, i32
  }
  func.func @transform_14(%arg0: i32) -> (i32, i32) {
    %c0_i32 = arith.constant 0 : i32
    %c0_i32_0 = arith.constant 0 : i32
    return %arg0, %c0_i32 : i32, i32
  }
}

</mosaic_0001>

<llo_original>
// kernel: tpu_custom_call.1
$region0: #{tpu_custom_call.1}
  #allocation0 [shape = 'u32[]', space=smem, size = 0x4, offset = 0x4, fixed_abs, tag = 'smem constant byte address 0x4 - core index']
  #allocation1 [shape = 'u32[144,128]{1,0:T(1,128)}', space=vmem, size = 0x12000, scoped, tag = 'internal scratch']
  %s0 = inlined_call_operand.hbm [shape: f32[256,128], index: 0, kind: input, shape index: {}]
  %s1 = inlined_call_operand.hbm [shape: f32[128,128], index: 1, kind: input, shape index: {}]
  %s2 = inlined_call_operand.hbm [shape: f32[1,128], index: 2, kind: input, shape index: {}]
  %s3 = inlined_call_operand.hbm [shape: f32[128,128], index: 3, kind: input, shape index: {}]
  %s4 = inlined_call_operand.hbm [shape: f32[1,128], index: 4, kind: input, shape index: {}]
  %s5 = inlined_call_operand.hbm [shape: f32[128,128], index: 5, kind: input, shape index: {}]
  %s6 = inlined_call_operand.hbm [shape: f32[1,128], index: 6, kind: input, shape index: {}]
  %s7 = inlined_call_operand.hbm [shape: f32[128,128], index: 7, kind: input, shape index: {}]
  %s8 = inlined_call_operand.hbm [shape: f32[1,128], index: 8, kind: input, shape index: {}]
  %s9 = inlined_call_operand.hbm [shape: f32[128,128], index: 9, kind: input, shape index: {}]
  %s10 = inlined_call_operand.hbm [shape: f32[1,128], index: 10, kind: input, shape index: {}]
  %s11 = inlined_call_operand.hbm [shape: f32[128,128], index: 11, kind: input, shape index: {}]
  %s12 = inlined_call_operand.hbm [shape: f32[1,128], index: 12, kind: input, shape index: {}]
  %s13 = inlined_call_operand.hbm [shape: f32[256,128], index: 13, kind: output, shape index: {0}]
  %s14 = inlined_call_operand.hbm [shape: f32[256,128], index: 14, kind: output, shape index: {1}]
  %15 = xla_tuple %s13, %s14
  %s16 = sld [smem:[#allocation0]]
  $region145: #{tpu_custom_call.1} parent=0
    _
  %s18 = ssub.s32 1, %s16
  %s19 = scalar_select 0, %s18, %s16
  $region1: #{tpu_custom_call.1} parent=0
    #allocation2 [shape = 'u8[131072]{0}', space=vmem, size = 0x20000, scoped, tag = 'input window, operand 0']
    #allocation3 [shape = 's32[2]{0}', space=sflag, size = 0x8, scoped, tag = 'scoped memory for tpu_custom_call.1']
    #allocation4 [shape = 's32[2]{0}', space=sflag, size = 0x8, scoped, tag = 'scoped memory for tpu_custom_call.1']
    #allocation5 [shape = 'u8[65536]{0}', space=vmem, size = 0x10000, scoped, tag = 'input window, operand 1, single buffered']
    #allocation6 [shape = 's32[1]{0}', space=sflag, size = 0x4, scoped, tag = 'scoped memory for tpu_custom_call.1']
    #allocation7 [shape = 'u8[512]{0}', space=vmem, size = 0x400, scoped, tag = 'input window, operand 2, single buffered']
    #allocation8 [shape = 'u8[65536]{0}', space=vmem, size = 0x10000, scoped, tag = 'input window, operand 3, single buffered']
    #allocation9 [shape = 's32[1]{0}', space=sflag, size = 0x4, scoped, tag = 'scoped memory for tpu_custom_call.1']
    #allocation10 [shape = 'u8[512]{0}', space=vmem, size = 0x400, scoped, tag = 'input window, operand 4, single buffered']
    #allocation11 [shape = 'u8[65536]{0}', space=vmem, size = 0x10000, scoped, tag = 'input window, operand 5, single buffered']
    #allocation12 [shape = 's32[1]{0}', space=sflag, size = 0x4, scoped, tag = 'scoped memory for tpu_custom_call.1']
    #allocation13 [shape = 'u8[512]{0}', space=vmem, size = 0x400, scoped, tag = 'input window, operand 6, single buffered']
    #allocation14 [shape = 'u8[65536]{0}', space=vmem, size = 0x10000, scoped, tag = 'input window, operand 7, single buffered']
    #allocation15 [shape = 's32[1]{0}', space=sflag, size = 0x4, scoped, tag = 'scoped memory for tpu_custom_call.1']
    #allocation16 [shape = 'u8[512]{0}', space=vmem, size = 0x400, scoped, tag = 'input window, operand 8, single buffered']
    #allocation17 [shape = 'u8[65536]{0}', space=vmem, size = 0x10000, scoped, tag = 'input window, operand 9, single buffered']
    #allocation18 [shape = 's32[1]{0}', space=sflag, size = 0x4, scoped, tag = 'scoped memory for tpu_custom_call.1']
    #allocation19 [shape = 'u8[512]{0}', space=vmem, size = 0x400, scoped, tag = 'input window, operand 10, single buffered']
    #allocation20 [shape = 'u8[65536]{0}', space=vmem, size = 0x10000, scoped, tag = 'input window, operand 11, single buffered']
    #allocation21 [shape = 's32[1]{0}', space=sflag, size = 0x4, scoped, tag = 'scoped memory for tpu_custom_call.1']
    #allocation22 [shape = 'u8[512]{0}', space=vmem, size = 0x400, scoped, tag = 'input window, operand 12, single buffered']
    #allocation23 [shape = 'u8[131072]{0}', space=vmem, size = 0x20000, scoped, tag = 'output window, operand 0']
    #allocation24 [shape = 'u8[131072]{0}', space=vmem, size = 0x20000, scoped, tag = 'output window, operand 1']
    #allocation25 [shape = 's32[2]{0}', space=sflag, size = 0x8, scoped, tag = 'scoped memory for tpu_custom_call.1']
    %20 = vsyncpa [#allocation3], 0
    %s21 = scalar_lea.sflag [#allocation3], 1
    %22 = vsyncpa %s21, 0
    %23 = vsyncpa [#allocation6], 0
    %24 = vsyncpa [#allocation9], 0
    %25 = vsyncpa [#allocation12], 0
    %26 = vsyncpa [#allocation15], 0
    %27 = vsyncpa [#allocation18], 0
    %28 = vsyncpa [#allocation21], 0
    %29 = vsyncpa [#allocation4], 0
    %s30 = scalar_lea.sflag [#allocation4], 1
    %31 = vsyncpa %s30, 0
    %32 = vsyncpa [#allocation25], 0
    %s33 = scalar_lea.sflag [#allocation25], 1
    %34 = vsyncpa %s33, 0
    loop: start=0, step=1, limit=4
    $region2: #{tpu_custom_call.1} parent=1 // loop_pre_header
      _
    $region3: #{tpu_custom_call.1} parent=1 // loop_header
      %s36 = sphi 0, %s40
      %p37 = scmp.ge.s32.totalorder %s36, 4
      %s46 = sphi 0, %s48
      %s49 = sphi 0, %s46
      %s50 = sphi 0, %s49
      %s66 = sphi 0, %s50
      %s70 = sphi 0, %s70
      %s72 = sphi 0, %s70
      %s73 = sphi 0, %s72
      %s87 = sphi 0, %s73
      %s91 = sphi 0, %s91
      %s93 = sphi 0, %s91
      %s94 = sphi 0, %s93
      %s108 = sphi 0, %s94
      %s112 = sphi 0, %s112
      %s114 = sphi 0, %s112
      %s115 = sphi 0, %s114
      %s129 = sphi 0, %s115
      %s133 = sphi 0, %s133
      %s135 = sphi 0, %s133
      %s136 = sphi 0, %s135
      %s150 = sphi 0, %s136
      %s154 = sphi 0, %s154
      %s156 = sphi 0, %s154
      %s157 = sphi 0, %s156
      %s171 = sphi 0, %s157
      %s175 = sphi 0, %s175
      %s177 = sphi 0, %s175
      %s178 = sphi 0, %s177
      %s192 = sphi 0, %s178
      %s196 = sphi 0, %s196
      %s198 = sphi 0, %s196
      %s199 = sphi 0, %s198
      %s213 = sphi 0, %s199
      %s217 = sphi 0, %s217
      %s219 = sphi 0, %s217
      %s220 = sphi 0, %s219
      %s234 = sphi 0, %s220
      %s238 = sphi 0, %s238
      %s240 = sphi 0, %s238
      %s241 = sphi 0, %s240
      %s255 = sphi 0, %s241
      %s259 = sphi 0, %s259
      %s261 = sphi 0, %s259
      %s262 = sphi 0, %s261
      %s276 = sphi 0, %s262
      %s280 = sphi 0, %s280
      %s282 = sphi 0, %s280
      %s283 = sphi 0, %s282
      %s297 = sphi 0, %s283
      %s301 = sphi 0, %s301
      %s303 = sphi 0, %s301
      %s304 = sphi 0, %s303
      %s318 = sphi 0, %s304
      %s324 = sphi 0, %s326
      %s327 = sphi 0, %s324
      %s328 = sphi 0, %s327
      %s344 = sphi 0, %s328
      %s350 = sphi 0, %s352
      %s353 = sphi 0, %s350
      %s354 = sphi 0, %s353
      %s370 = sphi 0, %s354
    $region4: #{tpu_custom_call.1} parent=1 // loop_header_branch
      %39 = sbr.rel (%p37) target = $region8
    $region5: #{tpu_custom_call.1} parent=1 // loop_body
      %s41 = ssub.s32 %s36, 1
      %s42 = ssub.s32 %s36, 2
      %s43 = sadd.s32 %s36, 1
      %s44 = ssub.s32 %s36, %s43
      %p45 = scmp.eq.s32.totalorder %s44, 0
      %s47 = sadd.s32 %s46, 1
      %s48 = scalar_select %p45, %s46, %s47
      %p51 = pneg %p45
      %p52 = scmp.eq.s32.totalorder %s36, 1
      %p53 = por %p51, %p52
      %p54 = scmp.ne.s32.totalorder %s46, %s49
      %p55 = scmp.eq.s32.totalorder %s36, 0
      %p56 = por %p54, %p55
      %p57 = scmp.ne.s32.totalorder %s46, %s49
      %p58 = scmp.eq.s32.totalorder %s41, 1
      %p59 = por %p57, %p58
      %p60 = scmp.ne.s32.totalorder %s49, %s50
      %p61 = scmp.eq.s32.totalorder %s41, 0
      %p62 = por %p60, %p61
      %p63 = scmp.ne.s32.totalorder %s49, %s50
      %p64 = scmp.eq.s32.totalorder %s42, 1
      %p65 = por %p63, %p64
      %p67 = scmp.ne.s32.totalorder %s50, %s66
      %p68 = scmp.eq.s32.totalorder %s42, 0
      %p69 = por %p67, %p68
      %s71 = sadd.s32 %s70, 1
      %p74 = scmp.eq.s32.totalorder %s36, 1
      %p75 = scmp.ne.s32.totalorder %s70, %s72
      %p76 = scmp.eq.s32.totalorder %s36, 0
      %p77 = por %p75, %p76
      %p78 = scmp.ne.s32.totalorder %s70, %s72
      %p79 = scmp.eq.s32.totalorder %s41, 1
      %p80 = por %p78, %p79
      %p81 = scmp.ne.s32.totalorder %s72, %s73
      %p82 = scmp.eq.s32.totalorder %s41, 0
      %p83 = por %p81, %p82
      %p84 = scmp.ne.s32.totalorder %s72, %s73
      %p85 = scmp.eq.s32.totalorder %s42, 1
      %p86 = por %p84, %p85
      %p88 = scmp.ne.s32.totalorder %s73, %s87
      %p89 = scmp.eq.s32.totalorder %s42, 0
      %p90 = por %p88, %p89
      %s92 = sadd.s32 %s91, 1
      %p95 = scmp.eq.s32.totalorder %s36, 1
      %p96 = scmp.ne.s32.totalorder %s91, %s93
      %p97 = scmp.eq.s32.totalorder %s36, 0
      %p98 = por %p96, %p97
      %p99 = scmp.ne.s32.totalorder %s91, %s93
      %p100 = scmp.eq.s32.totalorder %s41, 1
      %p101 = por %p99, %p100
      %p102 = scmp.ne.s32.totalorder %s93, %s94
      %p103 = scmp.eq.s32.totalorder %s41, 0
      %p104 = por %p102, %p103
      %p105 = scmp.ne.s32.totalorder %s93, %s94
      %p106 = scmp.eq.s32.totalorder %s42, 1
      %p107 = por %p105, %p106
      %p109 = scmp.ne.s32.totalorder %s94, %s108
      %p110 = scmp.eq.s32.totalorder %s42, 0
      %p111 = por %p109, %p110
      %s113 = sadd.s32 %s112, 1
      %p116 = scmp.eq.s32.totalorder %s36, 1
      %p117 = scmp.ne.s32.totalorder %s112, %s114
      %p118 = scmp.eq.s32.totalorder %s36, 0
      %p119 = por %p117, %p118
      %p120 = scmp.ne.s32.totalorder %s112, %s114
      %p121 = scmp.eq.s32.totalorder %s41, 1
      %p122 = por %p120, %p121
      %p123 = scmp.ne.s32.totalorder %s114, %s115
      %p124 = scmp.eq.s32.totalorder %s41, 0
      %p125 = por %p123, %p124
      %p126 = scmp.ne.s32.totalorder %s114, %s115
      %p127 = scmp.eq.s32.totalorder %s42, 1
      %p128 = por %p126, %p127
      %p130 = scmp.ne.s32.totalorder %s115, %s129
      %p131 = scmp.eq.s32.totalorder %s42, 0
      %p132 = por %p130, %p131
      %s134 = sadd.s32 %s133, 1
      %p137 = scmp.eq.s32.totalorder %s36, 1
      %p138 = scmp.ne.s32.totalorder %s133, %s135
      %p139 = scmp.eq.s32.totalorder %s36, 0
      %p140 = por %p138, %p139
      %p141 = scmp.ne.s32.totalorder %s133, %s135
      %p142 = scmp.eq.s32.totalorder %s41, 1
      %p143 = por %p141, %p142
      %p144 = scmp.ne.s32.totalorder %s135, %s136
      %p145 = scmp.eq.s32.totalorder %s41, 0
      %p146 = por %p144, %p145
      %p147 = scmp.ne.s32.totalorder %s135, %s136
      %p148 = scmp.eq.s32.totalorder %s42, 1
      %p149 = por %p147, %p148
      %p151 = scmp.ne.s32.totalorder %s136, %s150
      %p152 = scmp.eq.s32.totalorder %s42, 0
      %p153 = por %p151, %p152
      %s155 = sadd.s32 %s154, 1
      %p158 = scmp.eq.s32.totalorder %s36, 1
      %p159 = scmp.ne.s32.totalorder %s154, %s156
      %p160 = scmp.eq.s32.totalorder %s36, 0
      %p161 = por %p159, %p160
      %p162 = scmp.ne.s32.totalorder %s154, %s156
      %p163 = scmp.eq.s32.totalorder %s41, 1
      %p164 = por %p162, %p163
      %p165 = scmp.ne.s32.totalorder %s156, %s157
      %p166 = scmp.eq.s32.totalorder %s41, 0
      %p167 = por %p165, %p166
      %p168 = scmp.ne.s32.totalorder %s156, %s157
      %p169 = scmp.eq.s32.totalorder %s42, 1
      %p170 = por %p168, %p169
      %p172 = scmp.ne.s32.totalorder %s157, %s171
      %p173 = scmp.eq.s32.totalorder %s42, 0
      %p174 = por %p172, %p173
      %s176 = sadd.s32 %s175, 1
      %p179 = scmp.eq.s32.totalorder %s36, 1
      %p180 = scmp.ne.s32.totalorder %s175, %s177
      %p181 = scmp.eq.s32.totalorder %s36, 0
      %p182 = por %p180, %p181
      %p183 = scmp.ne.s32.totalorder %s175, %s177
      %p184 = scmp.eq.s32.totalorder %s41, 1
      %p185 = por %p183, %p184
      %p186 = scmp.ne.s32.totalorder %s177, %s178
      %p187 = scmp.eq.s32.totalorder %s41, 0
      %p188 = por %p186, %p187
      %p189 = scmp.ne.s32.totalorder %s177, %s178
      %p190 = scmp.eq.s32.totalorder %s42, 1
      %p191 = por %p189, %p190
      %p193 = scmp.ne.s32.totalorder %s178, %s192
      %p194 = scmp.eq.s32.totalorder %s42, 0
      %p195 = por %p193, %p194
      %s197 = sadd.s32 %s196, 1
      %p200 = scmp.eq.s32.totalorder %s36, 1
      %p201 = scmp.ne.s32.totalorder %s196, %s198
      %p202 = scmp.eq.s32.totalorder %s36, 0
      %p203 = por %p201, %p202
      %p204 = scmp.ne.s32.totalorder %s196, %s198
      %p205 = scmp.eq.s32.totalorder %s41, 1
      %p206 = por %p204, %p205
      %p207 = scmp.ne.s32.totalorder %s198, %s199
      %p208 = scmp.eq.s32.totalorder %s41, 0
      %p209 = por %p207, %p208
      %p210 = scmp.ne.s32.totalorder %s198, %s199
      %p211 = scmp.eq.s32.totalorder %s42, 1
      %p212 = por %p210, %p211
      %p214 = scmp.ne.s32.totalorder %s199, %s213
      %p215 = scmp.eq.s32.totalorder %s42, 0
      %p216 = por %p214, %p215
      %s218 = sadd.s32 %s217, 1
      %p221 = scmp.eq.s32.totalorder %s36, 1
      %p222 = scmp.ne.s32.totalorder %s217, %s219
      %p223 = scmp.eq.s32.totalorder %s36, 0
      %p224 = por %p222, %p223
      %p225 = scmp.ne.s32.totalorder %s217, %s219
      %p226 = scmp.eq.s32.totalorder %s41, 1
      %p227 = por %p225, %p226
      %p228 = scmp.ne.s32.totalorder %s219, %s220
      %p229 = scmp.eq.s32.totalorder %s41, 0
      %p230 = por %p228, %p229
      %p231 = scmp.ne.s32.totalorder %s219, %s220
      %p232 = scmp.eq.s32.totalorder %s42, 1
      %p233 = por %p231, %p232
      %p235 = scmp.ne.s32.totalorder %s220, %s234
      %p236 = scmp.eq.s32.totalorder %s42, 0
      %p237 = por %p235, %p236
      %s239 = sadd.s32 %s238, 1
      %p242 = scmp.eq.s32.totalorder %s36, 1
      %p243 = scmp.ne.s32.totalorder %s238, %s240
      %p244 = scmp.eq.s32.totalorder %s36, 0
      %p245 = por %p243, %p244
      %p246 = scmp.ne.s32.totalorder %s238, %s240
      %p247 = scmp.eq.s32.totalorder %s41, 1
      %p248 = por %p246, %p247
      %p249 = scmp.ne.s32.totalorder %s240, %s241
      %p250 = scmp.eq.s32.totalorder %s41, 0
      %p251 = por %p249, %p250
      %p252 = scmp.ne.s32.totalorder %s240, %s241
      %p253 = scmp.eq.s32.totalorder %s42, 1
      %p254 = por %p252, %p253
      %p256 = scmp.ne.s32.totalorder %s241, %s255
      %p257 = scmp.eq.s32.totalorder %s42, 0
      %p258 = por %p256, %p257
      %s260 = sadd.s32 %s259, 1
      %p263 = scmp.eq.s32.totalorder %s36, 1
      %p264 = scmp.ne.s32.totalorder %s259, %s261
      %p265 = scmp.eq.s32.totalorder %s36, 0
      %p266 = por %p264, %p265
      %p267 = scmp.ne.s32.totalorder %s259, %s261
      %p268 = scmp.eq.s32.totalorder %s41, 1
      %p269 = por %p267, %p268
      %p270 = scmp.ne.s32.totalorder %s261, %s262
      %p271 = scmp.eq.s32.totalorder %s41, 0
      %p272 = por %p270, %p271
      %p273 = scmp.ne.s32.totalorder %s261, %s262
      %p274 = scmp.eq.s32.totalorder %s42, 1
      %p275 = por %p273, %p274
      %p277 = scmp.ne.s32.totalorder %s262, %s276
      %p278 = scmp.eq.s32.totalorder %s42, 0
      %p279 = por %p277, %p278
      %s281 = sadd.s32 %s280, 1
      %p284 = scmp.eq.s32.totalorder %s36, 1
      %p285 = scmp.ne.s32.totalorder %s280, %s282
      %p286 = scmp.eq.s32.totalorder %s36, 0
      %p287 = por %p285, %p286
      %p288 = scmp.ne.s32.totalorder %s280, %s282
      %p289 = scmp.eq.s32.totalorder %s41, 1
      %p290 = por %p288, %p289
      %p291 = scmp.ne.s32.totalorder %s282, %s283
      %p292 = scmp.eq.s32.totalorder %s41, 0
      %p293 = por %p291, %p292
      %p294 = scmp.ne.s32.totalorder %s282, %s283
      %p295 = scmp.eq.s32.totalorder %s42, 1
      %p296 = por %p294, %p295
      %p298 = scmp.ne.s32.totalorder %s283, %s297
      %p299 = scmp.eq.s32.totalorder %s42, 0
      %p300 = por %p298, %p299
      %s302 = sadd.s32 %s301, 1
      %p305 = scmp.eq.s32.totalorder %s36, 1
      %p306 = scmp.ne.s32.totalorder %s301, %s303
      %p307 = scmp.eq.s32.totalorder %s36, 0
      %p308 = por %p306, %p307
      %p309 = scmp.ne.s32.totalorder %s301, %s303
      %p310 = scmp.eq.s32.totalorder %s41, 1
      %p311 = por %p309, %p310
      %p312 = scmp.ne.s32.totalorder %s303, %s304
      %p313 = scmp.eq.s32.totalorder %s41, 0
      %p314 = por %p312, %p313
      %p315 = scmp.ne.s32.totalorder %s303, %s304
      %p316 = scmp.eq.s32.totalorder %s42, 1
      %p317 = por %p315, %p316
      %p319 = scmp.ne.s32.totalorder %s304, %s318
      %p320 = scmp.eq.s32.totalorder %s42, 0
      %p321 = por %p319, %p320
      %s322 = ssub.s32 %s36, %s43
      %p323 = scmp.eq.s32.totalorder %s322, 0
      %s325 = sadd.s32 %s324, 1
      %s326 = scalar_select %p323, %s324, %s325
      %p329 = pneg %p323
      %p330 = scmp.eq.s32.totalorder %s36, 1
      %p331 = por %p329, %p330
      %p332 = scmp.ne.s32.totalorder %s324, %s327
      %p333 = scmp.eq.s32.totalorder %s36, 0
      %p334 = por %p332, %p333
      %p335 = scmp.ne.s32.totalorder %s324, %s327
      %p336 = scmp.eq.s32.totalorder %s41, 1
      %p337 = por %p335, %p336
      %p338 = scmp.ne.s32.totalorder %s327, %s328
      %p339 = scmp.eq.s32.totalorder %s41, 0
      %p340 = por %p338, %p339
      %p341 = scmp.ne.s32.totalorder %s327, %s328
      %p342 = scmp.eq.s32.totalorder %s42, 1
      %p343 = por %p341, %p342
      %p345 = scmp.ne.s32.totalorder %s328, %s344
      %p346 = scmp.eq.s32.totalorder %s42, 0
      %p347 = por %p345, %p346
      %s348 = ssub.s32 %s36, %s43
      %p349 = scmp.eq.s32.totalorder %s348, 0
      %s351 = sadd.s32 %s350, 1
      %s352 = scalar_select %p349, %s350, %s351
      %p355 = pneg %p349
      %p356 = scmp.eq.s32.totalorder %s36, 1
      %p357 = por %p355, %p356
      %p358 = scmp.ne.s32.totalorder %s350, %s353
      %p359 = scmp.eq.s32.totalorder %s36, 0
      %p360 = por %p358, %p359
      %p361 = scmp.ne.s32.totalorder %s350, %s353
      %p362 = scmp.eq.s32.totalorder %s41, 1
      %p363 = por %p361, %p362
      %p364 = scmp.ne.s32.totalorder %s353, %s354
      %p365 = scmp.eq.s32.totalorder %s41, 0
      %p366 = por %p364, %p365
      %p367 = scmp.ne.s32.totalorder %s353, %s354
      %p368 = scmp.eq.s32.totalorder %s42, 1
      %p369 = por %p367, %p368
      %p371 = scmp.ne.s32.totalorder %s354, %s370
      %p372 = scmp.eq.s32.totalorder %s42, 0
      %p373 = por %p371, %p372
      %p374 = scmp.le.s32.totalorder 1, %s36
      %p375 = scmp.lt.s32.totalorder %s36, 3
      %p376 = pnand %p374, %p375
      %p377 = pneg %p376
      // Predicated region
      $region9: #{tpu_custom_call.1} parent=5 // pred_check
        _
      $region10: #{tpu_custom_call.1} parent=5 // pred_check_branch
        %379 = sbr.rel (%p376) target = $region12
      $region11: #{tpu_custom_call.1} parent=5 // pred_region
        %s380 = ssub.s32 %s36, 1
        // Predicated region
        $region13: #{tpu_custom_call.1} parent=11 // pred_check
          %p381 = pneg %p83
        $region14: #{tpu_custom_call.1} parent=11 // pred_check_branch
          %383 = sbr.rel (%p381) target = $region16
        $region15: #{tpu_custom_call.1} parent=11 // pred_region
          %s385 = ssub.s32 2048, 2048
          %386 = vsyncadd [#allocation6], %s385
          %s387 = sshll.u32 [#allocation5], 4
          %s388 = int_to_ptr.vmem [resolvable:$true] %s387
          %393 = dma.hbm_to_vmem [thread:$0]  %s1, 2048, %s388, [#allocation6], 128, 128, 8
        $region16: #{tpu_custom_call.1} parent=11 // pred_fallthru
          _
        // Predicated region
        $region17: #{tpu_custom_call.1} parent=11 // pred_check
          %p394 = pneg %p104
        $region18: #{tpu_custom_call.1} parent=11 // pred_check_branch
          %396 = sbr.rel (%p394) target = $region20
        $region19: #{tpu_custom_call.1} parent=11 // pred_region
          %s398 = ssub.s32 16, 16
          %399 = vsyncadd [#allocation6], %s398
          %s401 = sshll.u32 [#allocation7], 4
          %s402 = int_to_ptr.vmem [resolvable:$true] %s401
          %404 = dma.hbm_to_vmem [thread:$0]  %s2, 16, %s402, [#allocation6]
        $region20: #{tpu_custom_call.1} parent=11 // pred_fallthru
          _
        // Predicated region
        $region21: #{tpu_custom_call.1} parent=11 // pred_check
          %p405 = pneg %p125
        $region22: #{tpu_custom_call.1} parent=11 // pred_check_branch
          %407 = sbr.rel (%p405) target = $region24
        $region23: #{tpu_custom_call.1} parent=11 // pred_region
          %s409 = ssub.s32 2048, 2048
          %410 = vsyncadd [#allocation9], %s409
          %s411 = sshll.u32 [#allocation8], 4
          %s412 = int_to_ptr.vmem [resolvable:$true] %s411
          %417 = dma.hbm_to_vmem [thread:$0]  %s3, 2048, %s412, [#allocation9], 128, 128, 8
        $region24: #{tpu_custom_call.1} parent=11 // pred_fallthru
          _
        // Predicated region
        $region25: #{tpu_custom_call.1} parent=11 // pred_check
          %p418 = pneg %p146
        $region26: #{tpu_custom_call.1} parent=11 // pred_check_branch
          %420 = sbr.rel (%p418) target = $region28
        $region27: #{tpu_custom_call.1} parent=11 // pred_region
          %s422 = ssub.s32 16, 16
          %423 = vsyncadd [#allocation9], %s422
          %s425 = sshll.u32 [#allocation10], 4
          %s426 = int_to_ptr.vmem [resolvable:$true] %s425
          %428 = dma.hbm_to_vmem [thread:$0]  %s4, 16, %s426, [#allocation9]
        $region28: #{tpu_custom_call.1} parent=11 // pred_fallthru
          _
        // Predicated region
        $region29: #{tpu_custom_call.1} parent=11 // pred_check
          %p429 = pneg %p167
        $region30: #{tpu_custom_call.1} parent=11 // pred_check_branch
          %431 = sbr.rel (%p429) target = $region32
        $region31: #{tpu_custom_call.1} parent=11 // pred_region
          %s433 = ssub.s32 2048, 2048
          %434 = vsyncadd [#allocation12], %s433
          %s435 = sshll.u32 [#allocation11], 4
          %s436 = int_to_ptr.vmem [resolvable:$true] %s435
          %441 = dma.hbm_to_vmem [thread:$0]  %s5, 2048, %s436, [#allocation12], 128, 128, 8
        $region32: #{tpu_custom_call.1} parent=11 // pred_fallthru
          _
        // Predicated region
        $region33: #{tpu_custom_call.1} parent=11 // pred_check
          %p442 = pneg %p188
        $region34: #{tpu_custom_call.1} parent=11 // pred_check_branch
          %444 = sbr.rel (%p442) target = $region36
        $region35: #{tpu_custom_call.1} parent=11 // pred_region
          %s446 = ssub.s32 16, 16
          %447 = vsyncadd [#allocation12], %s446
          %s449 = sshll.u32 [#allocation13], 4
          %s450 = int_to_ptr.vmem [resolvable:$true] %s449
          %452 = dma.hbm_to_vmem [thread:$0]  %s6, 16, %s450, [#allocation12]
        $region36: #{tpu_custom_call.1} parent=11 // pred_fallthru
          _
        // Predicated region
        $region37: #{tpu_custom_call.1} parent=11 // pred_check
          %p453 = pneg %p209
        $region38: #{tpu_custom_call.1} parent=11 // pred_check_branch
          %455 = sbr.rel (%p453) target = $region40
        $region39: #{tpu_custom_call.1} parent=11 // pred_region
          %s457 = ssub.s32 2048, 2048
          %458 = vsyncadd [#allocation15], %s457
          %s459 = sshll.u32 [#allocation14], 4
          %s460 = int_to_ptr.vmem [resolvable:$true] %s459
          %465 = dma.hbm_to_vmem [thread:$0]  %s7, 2048, %s460, [#allocation15], 128, 128, 8
        $region40: #{tpu_custom_call.1} parent=11 // pred_fallthru
          _
        // Predicated region
        $region41: #{tpu_custom_call.1} parent=11 // pred_check
          %p466 = pneg %p230
        $region42: #{tpu_custom_call.1} parent=11 // pred_check_branch
          %468 = sbr.rel (%p466) target = $region44
        $region43: #{tpu_custom_call.1} parent=11 // pred_region
          %s470 = ssub.s32 16, 16
          %471 = vsyncadd [#allocation15], %s470
          %s473 = sshll.u32 [#allocation16], 4
          %s474 = int_to_ptr.vmem [resolvable:$true] %s473
          %476 = dma.hbm_to_vmem [thread:$0]  %s8, 16, %s474, [#allocation15]
        $region44: #{tpu_custom_call.1} parent=11 // pred_fallthru
          _
        // Predicated region
        $region45: #{tpu_custom_call.1} parent=11 // pred_check
          %p477 = pneg %p251
        $region46: #{tpu_custom_call.1} parent=11 // pred_check_branch
          %479 = sbr.rel (%p477) target = $region48
        $region47: #{tpu_custom_call.1} parent=11 // pred_region
          %s481 = ssub.s32 2048, 2048
          %482 = vsyncadd [#allocation18], %s481
          %s483 = sshll.u32 [#allocation17], 4
          %s484 = int_to_ptr.vmem [resolvable:$true] %s483
          %489 = dma.hbm_to_vmem [thread:$0]  %s9, 2048, %s484, [#allocation18], 128, 128, 8
        $region48: #{tpu_custom_call.1} parent=11 // pred_fallthru
          _
        // Predicated region
        $region49: #{tpu_custom_call.1} parent=11 // pred_check
          %p490 = pneg %p272
        $region50: #{tpu_custom_call.1} parent=11 // pred_check_branch
          %492 = sbr.rel (%p490) target = $region52
        $region51: #{tpu_custom_call.1} parent=11 // pred_region
          %s494 = ssub.s32 16, 16
          %495 = vsyncadd [#allocation18], %s494
          %s497 = sshll.u32 [#allocation19], 4
          %s498 = int_to_ptr.vmem [resolvable:$true] %s497
          %500 = dma.hbm_to_vmem [thread:$0]  %s10, 16, %s498, [#allocation18]
        $region52: #{tpu_custom_call.1} parent=11 // pred_fallthru
          _
        // Predicated region
        $region53: #{tpu_custom_call.1} parent=11 // pred_check
          %p501 = pneg %p293
        $region54: #{tpu_custom_call.1} parent=11 // pred_check_branch
          %503 = sbr.rel (%p501) target = $region56
        $region55: #{tpu_custom_call.1} parent=11 // pred_region
          %s505 = ssub.s32 2048, 2048
          %506 = vsyncadd [#allocation21], %s505
          %s507 = sshll.u32 [#allocation20], 4
          %s508 = int_to_ptr.vmem [resolvable:$true] %s507
          %513 = dma.hbm_to_vmem [thread:$0]  %s11, 2048, %s508, [#allocation21], 128, 128, 8
        $region56: #{tpu_custom_call.1} parent=11 // pred_fallthru
          _
        // Predicated region
        $region57: #{tpu_custom_call.1} parent=11 // pred_check
          %p514 = pneg %p314
        $region58: #{tpu_custom_call.1} parent=11 // pred_check_branch
          %516 = sbr.rel (%p514) target = $region60
        $region59: #{tpu_custom_call.1} parent=11 // pred_region
          %s518 = ssub.s32 16, 16
          %519 = vsyncadd [#allocation21], %s518
          %s521 = sshll.u32 [#allocation22], 4
          %s522 = int_to_ptr.vmem [resolvable:$true] %s521
          %524 = dma.hbm_to_vmem [thread:$0]  %s12, 16, %s522, [#allocation21]
        $region60: #{tpu_custom_call.1} parent=11 // pred_fallthru
          _
      $region12: #{tpu_custom_call.1} parent=5 // pred_fallthru
        _
      %p525 = scmp.lt.s32.totalorder %s36, 2
      // Predicated region
      $region61: #{tpu_custom_call.1} parent=5 // pred_check
        %p526 = pneg %p525
      $region62: #{tpu_custom_call.1} parent=5 // pred_check_branch
        %528 = sbr.rel (%p526) target = $region64
      $region63: #{tpu_custom_call.1} parent=5 // pred_region
        // Predicated region
        $region65: #{tpu_custom_call.1} parent=63 // pred_check
          %p529 = pneg %p56
        $region66: #{tpu_custom_call.1} parent=63 // pred_check_branch
          %531 = sbr.rel (%p529) target = $region68
        $region67: #{tpu_custom_call.1} parent=63 // pred_region
          %s532 = sand.u32 %s46, 1
          %s533 = scalar_lea.sflag [#allocation3], %s532
          %s534 = sand.u32 %s46, 1
          %s535 = smul.addr %s534, 128
          %s536 = scalar_lea.vmem [#allocation2], %s535
          %s537 = smul.u32 16, %s36
          %s539 = ssub.s32 2048, 2048
          %540 = vsyncadd %s533, %s539
          %s541 = smul.addr %s537, 128
          %s542 = scalar_lea.hbm %s0, %s541
          %s543 = sshll.u32 %s536, 4
          %s544 = int_to_ptr.vmem [resolvable:$true] %s543
          %549 = dma.hbm_to_vmem [thread:$0]  %s542, 2048, %s544, %s533, 128, 128, 8
        $region68: #{tpu_custom_call.1} parent=63 // pred_fallthru
          _
      $region64: #{tpu_custom_call.1} parent=5 // pred_fallthru
        _
      %p550 = scmp.le.s32.totalorder 1, %s36
      %p551 = scmp.lt.s32.totalorder %s36, 3
      %p552 = pnand %p550, %p551
      %p553 = pneg %p552
      // Predicated region
      $region69: #{tpu_custom_call.1} parent=5 // pred_check
        _
      $region70: #{tpu_custom_call.1} parent=5 // pred_check_branch
        %555 = sbr.rel (%p552) target = $region72
      $region71: #{tpu_custom_call.1} parent=5 // pred_region
        %s556 = ssub.s32 %s36, 1
        %s557 = sand.u32 %s49, 1
        %s558 = scalar_lea.sflag [#allocation3], %s557
        %s559 = sand.u32 %s49, 1
        %s560 = smul.addr %s559, 128
        %s561 = scalar_lea.vmem [#allocation2], %s560
        // Predicated region
        $region73: #{tpu_custom_call.1} parent=71 // pred_check
          %p562 = pneg %p62
        $region74: #{tpu_custom_call.1} parent=71 // pred_check_branch
          %564 = sbr.rel (%p562) target = $region76
        $region75: #{tpu_custom_call.1} parent=71 // pred_region
          %565 = dma.done %s558, 2048
        $region76: #{tpu_custom_call.1} parent=71 // pred_fallthru
          _
        // Predicated region
        $region77: #{tpu_custom_call.1} parent=71 // pred_check
          %p566 = pneg %p83
        $region78: #{tpu_custom_call.1} parent=71 // pred_check_branch
          %568 = sbr.rel (%p566) target = $region80
        $region79: #{tpu_custom_call.1} parent=71 // pred_region
          %569 = dma.done [#allocation6], 2048
        $region80: #{tpu_custom_call.1} parent=71 // pred_fallthru
          _
        // Predicated region
        $region81: #{tpu_custom_call.1} parent=71 // pred_check
          %p570 = pneg %p104
        $region82: #{tpu_custom_call.1} parent=71 // pred_check_branch
          %572 = sbr.rel (%p570) target = $region84
        $region83: #{tpu_custom_call.1} parent=71 // pred_region
          %573 = dma.done [#allocation6], 16
        $region84: #{tpu_custom_call.1} parent=71 // pred_fallthru
          _
        // Predicated region
        $region85: #{tpu_custom_call.1} parent=71 // pred_check
          %p574 = pneg %p125
        $region86: #{tpu_custom_call.1} parent=71 // pred_check_branch
          %576 = sbr.rel (%p574) target = $region88
        $region87: #{tpu_custom_call.1} parent=71 // pred_region
          %577 = dma.done [#allocation9], 2048
        $region88: #{tpu_custom_call.1} parent=71 // pred_fallthru
          _
        // Predicated region
        $region89: #{tpu_custom_call.1} parent=71 // pred_check
          %p578 = pneg %p146
        $region90: #{tpu_custom_call.1} parent=71 // pred_check_branch
          %580 = sbr.rel (%p578) target = $region92
        $region91: #{tpu_custom_call.1} parent=71 // pred_region
          %581 = dma.done [#allocation9], 16
        $region92: #{tpu_custom_call.1} parent=71 // pred_fallthru
          _
        // Predicated region
        $region93: #{tpu_custom_call.1} parent=71 // pred_check
          %p582 = pneg %p167
        $region94: #{tpu_custom_call.1} parent=71 // pred_check_branch
          %584 = sbr.rel (%p582) target = $region96
        $region95: #{tpu_custom_call.1} parent=71 // pred_region
          %585 = dma.done [#allocation12], 2048
        $region96: #{tpu_custom_call.1} parent=71 // pred_fallthru
          _
        // Predicated region
        $region97: #{tpu_custom_call.1} parent=71 // pred_check
          %p586 = pneg %p188
        $region98: #{tpu_custom_call.1} parent=71 // pred_check_branch
          %588 = sbr.rel (%p586) target = $region100
        $region99: #{tpu_custom_call.1} parent=71 // pred_region
          %589 = dma.done [#allocation12], 16
        $region100: #{tpu_custom_call.1} parent=71 // pred_fallthru
          _
        // Predicated region
        $region101: #{tpu_custom_call.1} parent=71 // pred_check
          %p590 = pneg %p209
        $region102: #{tpu_custom_call.1} parent=71 // pred_check_branch
          %592 = sbr.rel (%p590) target = $region104
        $region103: #{tpu_custom_call.1} parent=71 // pred_region
          %593 = dma.done [#allocation15], 2048
        $region104: #{tpu_custom_call.1} parent=71 // pred_fallthru
          _
        // Predicated region
        $region105: #{tpu_custom_call.1} parent=71 // pred_check
          %p594 = pneg %p230
        $region106: #{tpu_custom_call.1} parent=71 // pred_check_branch
          %596 = sbr.rel (%p594) target = $region108
        $region107: #{tpu_custom_call.1} parent=71 // pred_region
          %597 = dma.done [#allocation15], 16
        $region108: #{tpu_custom_call.1} parent=71 // pred_fallthru
          _
        // Predicated region
        $region109: #{tpu_custom_call.1} parent=71 // pred_check
          %p598 = pneg %p251
        $region110: #{tpu_custom_call.1} parent=71 // pred_check_branch
          %600 = sbr.rel (%p598) target = $region112
        $region111: #{tpu_custom_call.1} parent=71 // pred_region
          %601 = dma.done [#allocation18], 2048
        $region112: #{tpu_custom_call.1} parent=71 // pred_fallthru
          _
        // Predicated region
        $region113: #{tpu_custom_call.1} parent=71 // pred_check
          %p602 = pneg %p272
        $region114: #{tpu_custom_call.1} parent=71 // pred_check_branch
          %604 = sbr.rel (%p602) target = $region116
        $region115: #{tpu_custom_call.1} parent=71 // pred_region
          %605 = dma.done [#allocation18], 16
        $region116: #{tpu_custom_call.1} parent=71 // pred_fallthru
          _
        // Predicated region
        $region117: #{tpu_custom_call.1} parent=71 // pred_check
          %p606 = pneg %p293
        $region118: #{tpu_custom_call.1} parent=71 // pred_check_branch
          %608 = sbr.rel (%p606) target = $region120
        $region119: #{tpu_custom_call.1} parent=71 // pred_region
          %609 = dma.done [#allocation21], 2048
        $region120: #{tpu_custom_call.1} parent=71 // pred_fallthru
          _
        // Predicated region
        $region121: #{tpu_custom_call.1} parent=71 // pred_check
          %p610 = pneg %p314
        $region122: #{tpu_custom_call.1} parent=71 // pred_check_branch
          %612 = sbr.rel (%p610) target = $region124
        $region123: #{tpu_custom_call.1} parent=71 // pred_region
          %613 = dma.done [#allocation21], 16
        $region124: #{tpu_custom_call.1} parent=71 // pred_fallthru
          _
        %s614 = sand.u32 %s49, 1
        %s615 = scalar_lea.sflag [#allocation3], %s614
        %s616 = sand.u32 %s49, 1
        %s617 = smul.addr %s616, 128
        %s618 = scalar_lea.vmem [#allocation2], %s617
        %p619 = pneg %p62
        %p620 = pneg %p59
        %p621 = pneg %p83
        %p622 = pneg %p80
        %p623 = pneg %p104
        %p624 = pneg %p101
        %p625 = pneg %p125
        %p626 = pneg %p122
        %p627 = pneg %p146
        %p628 = pneg %p143
        %p629 = pneg %p167
        %p630 = pneg %p164
        %p631 = pneg %p188
        %p632 = pneg %p185
        %p633 = pneg %p209
        %p634 = pneg %p206
        %p635 = pneg %p230
        %p636 = pneg %p227
        %p637 = pneg %p251
        %p638 = pneg %p248
        %p639 = pneg %p272
        %p640 = pneg %p269
        %p641 = pneg %p293
        %p642 = pneg %p290
        %p643 = pneg %p314
        %p644 = pneg %p311
        %p645 = pneg %p340
        %p646 = pneg %p337
        %s647 = sand.u32 %s327, 1
        %s648 = scalar_lea.sflag [#allocation4], %s647
        %s649 = sand.u32 %s327, 1
        %s650 = smul.addr %s649, 128
        %s651 = scalar_lea.vmem [#allocation23], %s650
        %p652 = pneg %p366
        %p653 = pneg %p363
        %s654 = sand.u32 %s353, 1
        %s655 = scalar_lea.sflag [#allocation25], %s654
        %s656 = sand.u32 %s353, 1
        %s657 = smul.addr %s656, 128
        %s658 = scalar_lea.vmem [#allocation24], %s657
        %s659 = smul.u32 16, %s41
        %s660 = smul.u32 16, %s41
        %s661 = smul.u32 16, %s41
        %v662 = vld [vmem:[%s561] sm:$0xff]
        %v663 = vld [vmem:[%s561 + $0x8] sm:$0xff]
        %v664 = vld [vmem:[%s561 + $0x10] sm:$0xff]
        %v665 = vld [vmem:[%s561 + $0x18] sm:$0xff]
        %v666 = vld [vmem:[%s561 + $0x20] sm:$0xff]
        %v667 = vld [vmem:[%s561 + $0x28] sm:$0xff]
        %v668 = vld [vmem:[%s561 + $0x30] sm:$0xff]
        %v669 = vld [vmem:[%s561 + $0x38] sm:$0xff]
        %v670 = vld [vmem:[%s561 + $0x40] sm:$0xff]
        %v671 = vld [vmem:[%s561 + $0x48] sm:$0xff]
        %v672 = vld [vmem:[%s561 + $0x50] sm:$0xff]
        %v673 = vld [vmem:[%s561 + $0x58] sm:$0xff]
        %v674 = vld [vmem:[%s561 + $0x60] sm:$0xff]
        %v675 = vld [vmem:[%s561 + $0x68] sm:$0xff]
        %v676 = vld [vmem:[%s561 + $0x70] sm:$0xff]
        %v677 = vld [vmem:[%s561 + $0x78] sm:$0xff]
        %v678 = vld [vmem:[#allocation5] sm:$0xff]
        %v679 = vld [vmem:[#allocation5 + $0x8] sm:$0xff]
        %v680 = vld [vmem:[#allocation5 + $0x10] sm:$0xff]
        %v681 = vld [vmem:[#allocation5 + $0x18] sm:$0xff]
        %v682 = vld [vmem:[#allocation5 + $0x20] sm:$0xff]
        %v683 = vld [vmem:[#allocation5 + $0x28] sm:$0xff]
        %v684 = vld [vmem:[#allocation5 + $0x30] sm:$0xff]
        %v685 = vld [vmem:[#allocation5 + $0x38] sm:$0xff]
        %v686 = vld [vmem:[#allocation5 + $0x40] sm:$0xff]
        %v687 = vld [vmem:[#allocation5 + $0x48] sm:$0xff]
        %v688 = vld [vmem:[#allocation5 + $0x50] sm:$0xff]
        %v689 = vld [vmem:[#allocation5 + $0x58] sm:$0xff]
        %v690 = vld [vmem:[#allocation5 + $0x60] sm:$0xff]
        %v691 = vld [vmem:[#allocation5 + $0x68] sm:$0xff]
        %v692 = vld [vmem:[#allocation5 + $0x70] sm:$0xff]
        %v693 = vld [vmem:[#allocation5 + $0x78] sm:$0xff]
        %v694 = vld [vmem:[#allocation7] sm:$0x1]
        %v696 = vlaneseq
        %v697 = vshrl.u32 %v696, 7
        %v698 = vsub.s32 0, %v697
        %v699 = vrot.slane %v694, %v698
        %701 = vmatprep.subr.mxu0 0.0
        %702 = vmatpush1.msra.mxu0 %v678
        %703 = vmatprep.subr.mxu0 0.0
        %704 = vmatpush1.msra.mxu0 %v679
        %705 = vmatprep.subr.mxu0 0.0
        %706 = vmatpush1.msra.mxu0 %v680
        %707 = vmatprep.subr.mxu0 0.0
        %708 = vmatpush1.msra.mxu0 %v681
        %709 = vmatprep.subr.mxu0 0.0
        %710 = vmatpush1.msra.mxu0 %v682
        %711 = vmatprep.subr.mxu0 0.0
        %712 = vmatpush1.msra.mxu0 %v683
        %713 = vmatprep.subr.mxu0 0.0
        %714 = vmatpush1.msra.mxu0 %v684
        %715 = vmatprep.subr.mxu0 0.0
        %716 = vmatpush1.msra.mxu0 %v685
        %717 = vmatprep.subr.mxu0 0.0
        %718 = vmatpush1.msra.mxu0 %v686
        %719 = vmatprep.subr.mxu0 0.0
        %720 = vmatpush1.msra.mxu0 %v687
        %721 = vmatprep.subr.mxu0 0.0
        %722 = vmatpush1.msra.mxu0 %v688
        %723 = vmatprep.subr.mxu0 0.0
        %724 = vmatpush1.msra.mxu0 %v689
        %725 = vmatprep.subr.mxu0 0.0
        %726 = vmatpush1.msra.mxu0 %v690
        %727 = vmatprep.subr.mxu0 0.0
        %728 = vmatpush1.msra.mxu0 %v691
        %729 = vmatprep.subr.mxu0 0.0
        %730 = vmatpush1.msra.mxu0 %v692
        %731 = vmatprep.subr.mxu0 0.0
        %732 = vmatpush1.msra.mxu0 %v693
        %733 = vmatprep.subr.mxu0 0.0
        %734 = vmatpush1.msra.mxu0 0.0
        %735 = vmatprep.subr.mxu0 0.0
        %736 = vmatpush1.msra.mxu0 0.0
        %737 = vmatprep.subr.mxu0 0.0
        %738 = vmatpush1.msra.mxu0 0.0
        %739 = vmatprep.subr.mxu0 0.0
        %740 = vmatpush1.msra.mxu0 0.0
        %741 = vmatprep.subr.mxu0 0.0
        %742 = vmatpush1.msra.mxu0 0.0
        %743 = vmatprep.subr.mxu0 0.0
        %744 = vmatpush1.msra.mxu0 0.0
        %745 = vmatprep.subr.mxu0 0.0
        %746 = vmatpush1.msra.mxu0 0.0
        %747 = vmatprep.subr.mxu0 0.0
        %748 = vmatpush1.msra.mxu0 0.0
        %749 = vmatprep.subr.mxu0 0.0
        %750 = vmatpush1.msra.mxu0 0.0
        %751 = vmatprep.subr.mxu0 0.0
        %752 = vmatpush1.msra.mxu0 0.0
        %753 = vmatprep.subr.mxu0 0.0
        %754 = vmatpush1.msra.mxu0 0.0
        %755 = vmatprep.subr.mxu0 0.0
        %756 = vmatpush1.msra.mxu0 0.0
        %757 = vmatprep.subr.mxu0 0.0
        %758 = vmatpush1.msra.mxu0 0.0
        %759 = vmatprep.subr.mxu0 0.0
        %760 = vmatpush1.msra.mxu0 0.0
        %761 = vmatprep.subr.mxu0 0.0
        %762 = vmatpush1.msra.mxu0 0.0
        %763 = vmatprep.subr.mxu0 0.0
        %764 = vmatpush1.msra.mxu0 0.0
        %765 = vmatprep.mubr.f32.mxu0 0.0
        %766 = vmatmul.mubr.f32.gmra.mrb[0].mxu0 %v662
        %v767 = vpop.f32.mrb[0].mxu0
        %v768 = vadd.f32 %v699, %v767
        %v769 = vpop.f32.mrb[0].mxu0
        %770 = vmatprep.mubr.f32.mxu0 0.0
        %771 = vmatmul.mubr.f32.gmra.mrb[0].mxu0 %v663
        %v772 = vpop.f32.mrb[0].mxu0
        %v773 = vadd.f32 %v699, %v772
        %v774 = vpop.f32.mrb[0].mxu0
        %775 = vmatprep.mubr.f32.mxu0 0.0
        %776 = vmatmul.mubr.f32.gmra.mrb[0].mxu0 %v664
        %v777 = vpop.f32.mrb[0].mxu0
        %v778 = vadd.f32 %v699, %v777
        %v779 = vpop.f32.mrb[0].mxu0
        %780 = vmatprep.mubr.f32.mxu0 0.0
        %781 = vmatmul.mubr.f32.gmra.mrb[0].mxu0 %v665
        %v782 = vpop.f32.mrb[0].mxu0
        %v783 = vadd.f32 %v699, %v782
        %v784 = vpop.f32.mrb[0].mxu0
        %785 = vmatprep.mubr.f32.mxu0 0.0
        %786 = vmatmul.mubr.f32.gmra.mrb[0].mxu0 %v666
        %v787 = vpop.f32.mrb[0].mxu0
        %v788 = vadd.f32 %v699, %v787
        %v789 = vpop.f32.mrb[0].mxu0
        %790 = vmatprep.mubr.f32.mxu0 0.0
        %791 = vmatmul.mubr.f32.gmra.mrb[0].mxu0 %v667
        %v792 = vpop.f32.mrb[0].mxu0
        %v793 = vadd.f32 %v699, %v792
        %v794 = vpop.f32.mrb[0].mxu0
        %795 = vmatprep.mubr.f32.mxu0 0.0
        %796 = vmatmul.mubr.f32.gmra.mrb[0].mxu0 %v668
        %v797 = vpop.f32.mrb[0].mxu0
        %v798 = vadd.f32 %v699, %v797
        %v799 = vpop.f32.mrb[0].mxu0
        %800 = vmatprep.mubr.f32.mxu0 0.0
        %801 = vmatmul.mubr.f32.gmra.mrb[0].mxu0 %v669
        %v802 = vpop.f32.mrb[0].mxu0
        %v803 = vadd.f32 %v699, %v802
        %v804 = vpop.f32.mrb[0].mxu0
        %805 = vmatprep.mubr.f32.mxu0 0.0
        %806 = vmatmul.mubr.f32.gmra.mrb[0].mxu0 %v670
        %v807 = vpop.f32.mrb[0].mxu0
        %v808 = vadd.f32 %v699, %v807
        %v809 = vpop.f32.mrb[0].mxu0
        %810 = vmatprep.mubr.f32.mxu0 0.0
        %811 = vmatmul.mubr.f32.gmra.mrb[0].mxu0 %v671
        %v812 = vpop.f32.mrb[0].mxu0
        %v813 = vadd.f32 %v699, %v812
        %v814 = vpop.f32.mrb[0].mxu0
        %815 = vmatprep.mubr.f32.mxu0 0.0
        %816 = vmatmul.mubr.f32.gmra.mrb[0].mxu0 %v672
        %v817 = vpop.f32.mrb[0].mxu0
        %v818 = vadd.f32 %v699, %v817
        %v819 = vpop.f32.mrb[0].mxu0
        %820 = vmatprep.mubr.f32.mxu0 0.0
        %821 = vmatmul.mubr.f32.gmra.mrb[0].mxu0 %v673
        %v822 = vpop.f32.mrb[0].mxu0
        %v823 = vadd.f32 %v699, %v822
        %v824 = vpop.f32.mrb[0].mxu0
        %825 = vmatprep.mubr.f32.mxu0 0.0
        %826 = vmatmul.mubr.f32.gmra.mrb[0].mxu0 %v674
        %v827 = vpop.f32.mrb[0].mxu0
        %v828 = vadd.f32 %v699, %v827
        %v829 = vpop.f32.mrb[0].mxu0
        %830 = vmatprep.mubr.f32.mxu0 0.0
        %831 = vmatmul.mubr.f32.gmra.mrb[0].mxu0 %v675
        %v832 = vpop.f32.mrb[0].mxu0
        %v833 = vadd.f32 %v699, %v832
        %v834 = vpop.f32.mrb[0].mxu0
        %835 = vmatprep.mubr.f32.mxu0 0.0
        %836 = vmatmul.mubr.f32.gmra.mrb[0].mxu0 %v676
        %v837 = vpop.f32.mrb[0].mxu0
        %v838 = vadd.f32 %v699, %v837
        %v839 = vpop.f32.mrb[0].mxu0
        %840 = vmatprep.mubr.f32.mxu0 0.0
        %841 = vmatmul.mubr.f32.gmra.mrb[0].mxu0 %v677
        %v842 = vpop.f32.mrb[0].mxu0
        %v843 = vadd.f32 %v699, %v842
        %v844 = vpop.f32.mrb[0].mxu0
        %845 = vdwg.mxu0
        %v846 = vmax.f32 %v768, 0.0
        %v847 = vmax.f32 %v773, 0.0
        %v848 = vmax.f32 %v778, 0.0
        %v849 = vmax.f32 %v783, 0.0
        %v850 = vmax.f32 %v788, 0.0
        %v851 = vmax.f32 %v793, 0.0
        %v852 = vmax.f32 %v798, 0.0
        %v853 = vmax.f32 %v803, 0.0
        %v854 = vmax.f32 %v808, 0.0
        %v855 = vmax.f32 %v813, 0.0
        %v856 = vmax.f32 %v818, 0.0
        %v857 = vmax.f32 %v823, 0.0
        %v858 = vmax.f32 %v828, 0.0
        %v859 = vmax.f32 %v833, 0.0
        %v860 = vmax.f32 %v838, 0.0
        %v861 = vmax.f32 %v843, 0.0
        %v862 = vld [vmem:[#allocation8] sm:$0xff]
        %v863 = vld [vmem:[#allocation8 + $0x8] sm:$0xff]
        %v864 = vld [vmem:[#allocation8 + $0x10] sm:$0xff]
        %v865 = vld [vmem:[#allocation8 + $0x18] sm:$0xff]
        %v866 = vld [vmem:[#allocation8 + $0x20] sm:$0xff]
        %v867 = vld [vmem:[#allocation8 + $0x28] sm:$0xff]
        %v868 = vld [vmem:[#allocation8 + $0x30] sm:$0xff]
        %v869 = vld [vmem:[#allocation8 + $0x38] sm:$0xff]
        %v870 = vld [vmem:[#allocation8 + $0x40] sm:$0xff]
        %v871 = vld [vmem:[#allocation8 + $0x48] sm:$0xff]
        %v872 = vld [vmem:[#allocation8 + $0x50] sm:$0xff]
        %v873 = vld [vmem:[#allocation8 + $0x58] sm:$0xff]
        %v874 = vld [vmem:[#allocation8 + $0x60] sm:$0xff]
        %v875 = vld [vmem:[#allocation8 + $0x68] sm:$0xff]
        %v876 = vld [vmem:[#allocation8 + $0x70] sm:$0xff]
        %v877 = vld [vmem:[#allocation8 + $0x78] sm:$0xff]
        %v878 = vld [vmem:[#allocation10] sm:$0x1]
        %v880 = vlaneseq
        %v881 = vshrl.u32 %v880, 7
        %v882 = vsub.s32 0, %v881
        %v883 = vrot.slane %v878, %v882
        %885 = vmatprep.subr.mxu0 0.0
        %886 = vmatpush1.msra.mxu0 %v862
        %887 = vmatprep.subr.mxu0 0.0
        %888 = vmatpush1.msra.mxu0 %v863
        %889 = vmatprep.subr.mxu0 0.0
        %890 = vmatpush1.msra.mxu0 %v864
        %891 = vmatprep.subr.mxu0 0.0
        %892 = vmatpush1.msra.mxu0 %v865
        %893 = vmatprep.subr.mxu0 0.0
        %894 = vmatpush1.msra.mxu0 %v866
        %895 = vmatprep.subr.mxu0 0.0
        %896 = vmatpush1.msra.mxu0 %v867
        %897 = vmatprep.subr.mxu0 0.0
        %898 = vmatpush1.msra.mxu0 %v868
        %899 = vmatprep.subr.mxu0 0.0
        %900 = vmatpush1.msra.mxu0 %v869
        %901 = vmatprep.subr.mxu0 0.0
        %902 = vmatpush1.msra.mxu0 %v870
        %903 = vmatprep.subr.mxu0 0.0
        %904 = vmatpush1.msra.mxu0 %v871
        %905 = vmatprep.subr.mxu0 0.0
        %906 = vmatpush1.msra.mxu0 %v872
        %907 = vmatprep.subr.mxu0 0.0
        %908 = vmatpush1.msra.mxu0 %v873
        %909 = vmatprep.subr.mxu0 0.0
        %910 = vmatpush1.msra.mxu0 %v874
        %911 = vmatprep.subr.mxu0 0.0
        %912 = vmatpush1.msra.mxu0 %v875
        %913 = vmatprep.subr.mxu0 0.0
        %914 = vmatpush1.msra.mxu0 %v876
        %915 = vmatprep.subr.mxu0 0.0
        %916 = vmatpush1.msra.mxu0 %v877
        %917 = vmatprep.subr.mxu0 0.0
        %918 = vmatpush1.msra.mxu0 0.0
        %919 = vmatprep.subr.mxu0 0.0
        %920 = vmatpush1.msra.mxu0 0.0
        %921 = vmatprep.subr.mxu0 0.0
        %922 = vmatpush1.msra.mxu0 0.0
        %923 = vmatprep.subr.mxu0 0.0
        %924 = vmatpush1.msra.mxu0 0.0
        %925 = vmatprep.subr.mxu0 0.0
        %926 = vmatpush1.msra.mxu0 0.0
        %927 = vmatprep.subr.mxu0 0.0
        %928 = vmatpush1.msra.mxu0 0.0
        %929 = vmatprep.subr.mxu0 0.0
        %930 = vmatpush1.msra.mxu0 0.0
        %931 = vmatprep.subr.mxu0 0.0
        %932 = vmatpush1.msra.mxu0 0.0
        %933 = vmatprep.subr.mxu0 0.0
        %934 = vmatpush1.msra.mxu0 0.0
        %935 = vmatprep.subr.mxu0 0.0
        %936 = vmatpush1.msra.mxu0 0.0
        %937 = vmatprep.subr.mxu0 0.0
        %938 = vmatpush1.msra.mxu0 0.0
        %939 = vmatprep.subr.mxu0 0.0
        %940 = vmatpush1.msra.mxu0 0.0
        %941 = vmatprep.subr.mxu0 0.0
        %942 = vmatpush1.msra.mxu0 0.0
        %943 = vmatprep.subr.mxu0 0.0
        %944 = vmatpush1.msra.mxu0 0.0
        %945 = vmatprep.subr.mxu0 0.0
        %946 = vmatpush1.msra.mxu0 0.0
        %947 = vmatprep.subr.mxu0 0.0
        %948 = vmatpush1.msra.mxu0 0.0
        %949 = vmatprep.mubr.f32.mxu0 0.0
        %950 = vmatmul.mubr.f32.gmra.mrb[0].mxu0 %v846
        %v951 = vpop.f32.mrb[0].mxu0
        %v952 = vadd.f32 %v883, %v951
        %v953 = vpop.f32.mrb[0].mxu0
        %954 = vmatprep.mubr.f32.mxu0 0.0
        %955 = vmatmul.mubr.f32.gmra.mrb[0].mxu0 %v847
        %v956 = vpop.f32.mrb[0].mxu0
        %v957 = vadd.f32 %v883, %v956
        %v958 = vpop.f32.mrb[0].mxu0
        %959 = vmatprep.mubr.f32.mxu0 0.0
        %960 = vmatmul.mubr.f32.gmra.mrb[0].mxu0 %v848
        %v961 = vpop.f32.mrb[0].mxu0
        %v962 = vadd.f32 %v883, %v961
        %v963 = vpop.f32.mrb[0].mxu0
        %964 = vmatprep.mubr.f32.mxu0 0.0
        %965 = vmatmul.mubr.f32.gmra.mrb[0].mxu0 %v849
        %v966 = vpop.f32.mrb[0].mxu0
        %v967 = vadd.f32 %v883, %v966
        %v968 = vpop.f32.mrb[0].mxu0
        %969 = vmatprep.mubr.f32.mxu0 0.0
        %970 = vmatmul.mubr.f32.gmra.mrb[0].mxu0 %v850
        %v971 = vpop.f32.mrb[0].mxu0
        %v972 = vadd.f32 %v883, %v971
        %v973 = vpop.f32.mrb[0].mxu0
        %974 = vmatprep.mubr.f32.mxu0 0.0
        %975 = vmatmul.mubr.f32.gmra.mrb[0].mxu0 %v851
        %v976 = vpop.f32.mrb[0].mxu0
        %v977 = vadd.f32 %v883, %v976
        %v978 = vpop.f32.mrb[0].mxu0
        %979 = vmatprep.mubr.f32.mxu0 0.0
        %980 = vmatmul.mubr.f32.gmra.mrb[0].mxu0 %v852
        %v981 = vpop.f32.mrb[0].mxu0
        %v982 = vadd.f32 %v883, %v981
        %v983 = vpop.f32.mrb[0].mxu0
        %984 = vmatprep.mubr.f32.mxu0 0.0
        %985 = vmatmul.mubr.f32.gmra.mrb[0].mxu0 %v853
        %v986 = vpop.f32.mrb[0].mxu0
        %v987 = vadd.f32 %v883, %v986
        %v988 = vpop.f32.mrb[0].mxu0
        %989 = vmatprep.mubr.f32.mxu0 0.0
        %990 = vmatmul.mubr.f32.gmra.mrb[0].mxu0 %v854
        %v991 = vpop.f32.mrb[0].mxu0
        %v992 = vadd.f32 %v883, %v991
        %v993 = vpop.f32.mrb[0].mxu0
        %994 = vmatprep.mubr.f32.mxu0 0.0
        %995 = vmatmul.mubr.f32.gmra.mrb[0].mxu0 %v855
        %v996 = vpop.f32.mrb[0].mxu0
        %v997 = vadd.f32 %v883, %v996
        %v998 = vpop.f32.mrb[0].mxu0
        %999 = vmatprep.mubr.f32.mxu0 0.0
        %1000 = vmatmul.mubr.f32.gmra.mrb[0].mxu0 %v856
        %v1001 = vpop.f32.mrb[0].mxu0
        %v1002 = vadd.f32 %v883, %v1001
        %v1003 = vpop.f32.mrb[0].mxu0
        %1004 = vmatprep.mubr.f32.mxu0 0.0
        %1005 = vmatmul.mubr.f32.gmra.mrb[0].mxu0 %v857
        %v1006 = vpop.f32.mrb[0].mxu0
        %v1007 = vadd.f32 %v883, %v1006
        %v1008 = vpop.f32.mrb[0].mxu0
        %1009 = vmatprep.mubr.f32.mxu0 0.0
        %1010 = vmatmul.mubr.f32.gmra.mrb[0].mxu0 %v858
        %v1011 = vpop.f32.mrb[0].mxu0
        %v1012 = vadd.f32 %v883, %v1011
        %v1013 = vpop.f32.mrb[0].mxu0
        %1014 = vmatprep.mubr.f32.mxu0 0.0
        %1015 = vmatmul.mubr.f32.gmra.mrb[0].mxu0 %v859
        %v1016 = vpop.f32.mrb[0].mxu0
        %v1017 = vadd.f32 %v883, %v1016
        %v1018 = vpop.f32.mrb[0].mxu0
        %1019 = vmatprep.mubr.f32.mxu0 0.0
        %1020 = vmatmul.mubr.f32.gmra.mrb[0].mxu0 %v860
        %v1021 = vpop.f32.mrb[0].mxu0
        %v1022 = vadd.f32 %v883, %v1021
        %v1023 = vpop.f32.mrb[0].mxu0
        %1024 = vmatprep.mubr.f32.mxu0 0.0
        %1025 = vmatmul.mubr.f32.gmra.mrb[0].mxu0 %v861
        %v1026 = vpop.f32.mrb[0].mxu0
        %v1027 = vadd.f32 %v883, %v1026
        %v1028 = vpop.f32.mrb[0].mxu0
        %1029 = vdwg.mxu0
        %v1030 = vmax.f32 %v952, 0.0
        %v1031 = vmax.f32 %v957, 0.0
        %v1032 = vmax.f32 %v962, 0.0
        %v1033 = vmax.f32 %v967, 0.0
        %v1034 = vmax.f32 %v972, 0.0
        %v1035 = vmax.f32 %v977, 0.0
        %v1036 = vmax.f32 %v982, 0.0
        %v1037 = vmax.f32 %v987, 0.0
        %v1038 = vmax.f32 %v992, 0.0
        %v1039 = vmax.f32 %v997, 0.0
        %v1040 = vmax.f32 %v1002, 0.0
        %v1041 = vmax.f32 %v1007, 0.0
        %v1042 = vmax.f32 %v1012, 0.0
        %v1043 = vmax.f32 %v1017, 0.0
        %v1044 = vmax.f32 %v1022, 0.0
        %v1045 = vmax.f32 %v1027, 0.0
        %v1046 = vld [vmem:[#allocation11] sm:$0xff]
        %v1047 = vld [vmem:[#allocation11 + $0x8] sm:$0xff]
        %v1048 = vld [vmem:[#allocation11 + $0x10] sm:$0xff]
        %v1049 = vld [vmem:[#allocation11 + $0x18] sm:$0xff]
        %v1050 = vld [vmem:[#allocation11 + $0x20] sm:$0xff]
        %v1051 = vld [vmem:[#allocation11 + $0x28] sm:$0xff]
        %v1052 = vld [vmem:[#allocation11 + $0x30] sm:$0xff]
        %v1053 = vld [vmem:[#allocation11 + $0x38] sm:$0xff]
        %v1054 = vld [vmem:[#allocation11 + $0x40] sm:$0xff]
        %v1055 = vld [vmem:[#allocation11 + $0x48] sm:$0xff]
        %v1056 = vld [vmem:[#allocation11 + $0x50] sm:$0xff]
        %v1057 = vld [vmem:[#allocation11 + $0x58] sm:$0xff]
        %v1058 = vld [vmem:[#allocation11 + $0x60] sm:$0xff]
        %v1059 = vld [vmem:[#allocation11 + $0x68] sm:$0xff]
        %v1060 = vld [vmem:[#allocation11 + $0x70] sm:$0xff]
        %v1061 = vld [vmem:[#allocation11 + $0x78] sm:$0xff]
        %v1062 = vld [vmem:[#allocation13] sm:$0x1]
        %v1064 = vlaneseq
        %v1065 = vshrl.u32 %v1064, 7
        %v1066 = vsub.s32 0, %v1065
        %v1067 = vrot.slane %v1062, %v1066
        %1069 = vmatprep.subr.mxu0 0.0
        %1070 = vmatpush1.msra.mxu0 %v1046
        %1071 = vmatprep.subr.mxu0 0.0
        %1072 = vmatpush1.msra.mxu0 %v1047
        %1073 = vmatprep.subr.mxu0 0.0
        %1074 = vmatpush1.msra.mxu0 %v1048
        %1075 = vmatprep.subr.mxu0 0.0
        %1076 = vmatpush1.msra.mxu0 %v1049
        %1077 = vmatprep.subr.mxu0 0.0
        %1078 = vmatpush1.msra.mxu0 %v1050
        %1079 = vmatprep.subr.mxu0 0.0
        %1080 = vmatpush1.msra.mxu0 %v1051
        %1081 = vmatprep.subr.mxu0 0.0
        %1082 = vmatpush1.msra.mxu0 %v1052
        %1083 = vmatprep.subr.mxu0 0.0
        %1084 = vmatpush1.msra.mxu0 %v1053
        %1085 = vmatprep.subr.mxu0 0.0
        %1086 = vmatpush1.msra.mxu0 %v1054
        %1087 = vmatprep.subr.mxu0 0.0
        %1088 = vmatpush1.msra.mxu0 %v1055
        %1089 = vmatprep.subr.mxu0 0.0
        %1090 = vmatpush1.msra.mxu0 %v1056
        %1091 = vmatprep.subr.mxu0 0.0
        %1092 = vmatpush1.msra.mxu0 %v1057
        %1093 = vmatprep.subr.mxu0 0.0
        %1094 = vmatpush1.msra.mxu0 %v1058
        %1095 = vmatprep.subr.mxu0 0.0
        %1096 = vmatpush1.msra.mxu0 %v1059
        %1097 = vmatprep.subr.mxu0 0.0
        %1098 = vmatpush1.msra.mxu0 %v1060
        %1099 = vmatprep.subr.mxu0 0.0
        %1100 = vmatpush1.msra.mxu0 %v1061
        %1101 = vmatprep.subr.mxu0 0.0
        %1102 = vmatpush1.msra.mxu0 0.0
        %1103 = vmatprep.subr.mxu0 0.0
        %1104 = vmatpush1.msra.mxu0 0.0
        %1105 = vmatprep.subr.mxu0 0.0
        %1106 = vmatpush1.msra.mxu0 0.0
        %1107 = vmatprep.subr.mxu0 0.0
        %1108 = vmatpush1.msra.mxu0 0.0
        %1109 = vmatprep.subr.mxu0 0.0
        %1110 = vmatpush1.msra.mxu0 0.0
        %1111 = vmatprep.subr.mxu0 0.0
        %1112 = vmatpush1.msra.mxu0 0.0
        %1113 = vmatprep.subr.mxu0 0.0
        %1114 = vmatpush1.msra.mxu0 0.0
        %1115 = vmatprep.subr.mxu0 0.0
        %1116 = vmatpush1.msra.mxu0 0.0
        %1117 = vmatprep.subr.mxu0 0.0
        %1118 = vmatpush1.msra.mxu0 0.0
        %1119 = vmatprep.subr.mxu0 0.0
        %1120 = vmatpush1.msra.mxu0 0.0
        %1121 = vmatprep.subr.mxu0 0.0
        %1122 = vmatpush1.msra.mxu0 0.0
        %1123 = vmatprep.subr.mxu0 0.0
        %1124 = vmatpush1.msra.mxu0 0.0
        %1125 = vmatprep.subr.mxu0 0.0
        %1126 = vmatpush1.msra.mxu0 0.0
        %1127 = vmatprep.subr.mxu0 0.0
        %1128 = vmatpush1.msra.mxu0 0.0
        %1129 = vmatprep.subr.mxu0 0.0
        %1130 = vmatpush1.msra.mxu0 0.0
        %1131 = vmatprep.subr.mxu0 0.0
        %1132 = vmatpush1.msra.mxu0 0.0
        %1133 = vmatprep.mubr.f32.mxu0 0.0
        %1134 = vmatmul.mubr.f32.gmra.mrb[0].mxu0 %v1030
        %v1135 = vpop.f32.mrb[0].mxu0
        %v1136 = vadd.f32 %v1067, %v1135
        %v1137 = vpop.f32.mrb[0].mxu0
        %1138 = vmatprep.mubr.f32.mxu0 0.0
        %1139 = vmatmul.mubr.f32.gmra.mrb[0].mxu0 %v1031
        %v1140 = vpop.f32.mrb[0].mxu0
        %v1141 = vadd.f32 %v1067, %v1140
        %v1142 = vpop.f32.mrb[0].mxu0
        %1143 = vmatprep.mubr.f32.mxu0 0.0
        %1144 = vmatmul.mubr.f32.gmra.mrb[0].mxu0 %v1032
        %v1145 = vpop.f32.mrb[0].mxu0
        %v1146 = vadd.f32 %v1067, %v1145
        %v1147 = vpop.f32.mrb[0].mxu0
        %1148 = vmatprep.mubr.f32.mxu0 0.0
        %1149 = vmatmul.mubr.f32.gmra.mrb[0].mxu0 %v1033
        %v1150 = vpop.f32.mrb[0].mxu0
        %v1151 = vadd.f32 %v1067, %v1150
        %v1152 = vpop.f32.mrb[0].mxu0
        %1153 = vmatprep.mubr.f32.mxu0 0.0
        %1154 = vmatmul.mubr.f32.gmra.mrb[0].mxu0 %v1034
        %v1155 = vpop.f32.mrb[0].mxu0
        %v1156 = vadd.f32 %v1067, %v1155
        %v1157 = vpop.f32.mrb[0].mxu0
        %1158 = vmatprep.mubr.f32.mxu0 0.0
        %1159 = vmatmul.mubr.f32.gmra.mrb[0].mxu0 %v1035
        %v1160 = vpop.f32.mrb[0].mxu0
        %v1161 = vadd.f32 %v1067, %v1160
        %v1162 = vpop.f32.mrb[0].mxu0
        %1163 = vmatprep.mubr.f32.mxu0 0.0
        %1164 = vmatmul.mubr.f32.gmra.mrb[0].mxu0 %v1036
        %v1165 = vpop.f32.mrb[0].mxu0
        %v1166 = vadd.f32 %v1067, %v1165
        %v1167 = vpop.f32.mrb[0].mxu0
        %1168 = vmatprep.mubr.f32.mxu0 0.0
        %1169 = vmatmul.mubr.f32.gmra.mrb[0].mxu0 %v1037
        %v1170 = vpop.f32.mrb[0].mxu0
        %v1171 = vadd.f32 %v1067, %v1170
        %v1172 = vpop.f32.mrb[0].mxu0
        %1173 = vmatprep.mubr.f32.mxu0 0.0
        %1174 = vmatmul.mubr.f32.gmra.mrb[0].mxu0 %v1038
        %v1175 = vpop.f32.mrb[0].mxu0
        %v1176 = vadd.f32 %v1067, %v1175
        %v1177 = vpop.f32.mrb[0].mxu0
        %1178 = vmatprep.mubr.f32.mxu0 0.0
        %1179 = vmatmul.mubr.f32.gmra.mrb[0].mxu0 %v1039
        %v1180 = vpop.f32.mrb[0].mxu0
        %v1181 = vadd.f32 %v1067, %v1180
        %v1182 = vpop.f32.mrb[0].mxu0
        %1183 = vmatprep.mubr.f32.mxu0 0.0
        %1184 = vmatmul.mubr.f32.gmra.mrb[0].mxu0 %v1040
        %v1185 = vpop.f32.mrb[0].mxu0
        %v1186 = vadd.f32 %v1067, %v1185
        %v1187 = vpop.f32.mrb[0].mxu0
        %1188 = vmatprep.mubr.f32.mxu0 0.0
        %1189 = vmatmul.mubr.f32.gmra.mrb[0].mxu0 %v1041
        %v1190 = vpop.f32.mrb[0].mxu0
        %v1191 = vadd.f32 %v1067, %v1190
        %v1192 = vpop.f32.mrb[0].mxu0
        %1193 = vmatprep.mubr.f32.mxu0 0.0
        %1194 = vmatmul.mubr.f32.gmra.mrb[0].mxu0 %v1042
        %v1195 = vpop.f32.mrb[0].mxu0
        %v1196 = vadd.f32 %v1067, %v1195
        %v1197 = vpop.f32.mrb[0].mxu0
        %1198 = vmatprep.mubr.f32.mxu0 0.0
        %1199 = vmatmul.mubr.f32.gmra.mrb[0].mxu0 %v1043
        %v1200 = vpop.f32.mrb[0].mxu0
        %v1201 = vadd.f32 %v1067, %v1200
        %v1202 = vpop.f32.mrb[0].mxu0
        %1203 = vmatprep.mubr.f32.mxu0 0.0
        %1204 = vmatmul.mubr.f32.gmra.mrb[0].mxu0 %v1044
        %v1205 = vpop.f32.mrb[0].mxu0
        %v1206 = vadd.f32 %v1067, %v1205
        %v1207 = vpop.f32.mrb[0].mxu0
        %1208 = vmatprep.mubr.f32.mxu0 0.0
        %1209 = vmatmul.mubr.f32.gmra.mrb[0].mxu0 %v1045
        %v1210 = vpop.f32.mrb[0].mxu0
        %v1211 = vadd.f32 %v1067, %v1210
        %v1212 = vpop.f32.mrb[0].mxu0
        %1213 = vdwg.mxu0
        %v1214 = vmax.f32 %v1136, 0.0
        %v1215 = vmax.f32 %v1141, 0.0
        %v1216 = vmax.f32 %v1146, 0.0
        %v1217 = vmax.f32 %v1151, 0.0
        %v1218 = vmax.f32 %v1156, 0.0
        %v1219 = vmax.f32 %v1161, 0.0
        %v1220 = vmax.f32 %v1166, 0.0
        %v1221 = vmax.f32 %v1171, 0.0
        %v1222 = vmax.f32 %v1176, 0.0
        %v1223 = vmax.f32 %v1181, 0.0
        %v1224 = vmax.f32 %v1186, 0.0
        %v1225 = vmax.f32 %v1191, 0.0
        %v1226 = vmax.f32 %v1196, 0.0
        %v1227 = vmax.f32 %v1201, 0.0
        %v1228 = vmax.f32 %v1206, 0.0
        %v1229 = vmax.f32 %v1211, 0.0
        %v1230 = vld [vmem:[#allocation14] sm:$0xff]
        %v1231 = vld [vmem:[#allocation14 + $0x8] sm:$0xff]
        %v1232 = vld [vmem:[#allocation14 + $0x10] sm:$0xff]
        %v1233 = vld [vmem:[#allocation14 + $0x18] sm:$0xff]
        %v1234 = vld [vmem:[#allocation14 + $0x20] sm:$0xff]
        %v1235 = vld [vmem:[#allocation14 + $0x28] sm:$0xff]
        %v1236 = vld [vmem:[#allocation14 + $0x30] sm:$0xff]
        %v1237 = vld [vmem:[#allocation14 + $0x38] sm:$0xff]
        %v1238 = vld [vmem:[#allocation14 + $0x40] sm:$0xff]
        %v1239 = vld [vmem:[#allocation14 + $0x48] sm:$0xff]
        %v1240 = vld [vmem:[#allocation14 + $0x50] sm:$0xff]
        %v1241 = vld [vmem:[#allocation14 + $0x58] sm:$0xff]
        %v1242 = vld [vmem:[#allocation14 + $0x60] sm:$0xff]
        %v1243 = vld [vmem:[#allocation14 + $0x68] sm:$0xff]
        %v1244 = vld [vmem:[#allocation14 + $0x70] sm:$0xff]
        %v1245 = vld [vmem:[#allocation14 + $0x78] sm:$0xff]
        %v1246 = vld [vmem:[#allocation16] sm:$0x1]
        %v1248 = vlaneseq
        %v1249 = vshrl.u32 %v1248, 7
        %v1250 = vsub.s32 0, %v1249
        %v1251 = vrot.slane %v1246, %v1250
        %1253 = vmatprep.subr.mxu0 0.0
        %1254 = vmatpush1.msra.mxu0 %v1230
        %1255 = vmatprep.subr.mxu0 0.0
        %1256 = vmatpush1.msra.mxu0 %v1231
        %1257 = vmatprep.subr.mxu0 0.0
        %1258 = vmatpush1.msra.mxu0 %v1232
        %1259 = vmatprep.subr.mxu0 0.0
        %1260 = vmatpush1.msra.mxu0 %v1233
        %1261 = vmatprep.subr.mxu0 0.0
        %1262 = vmatpush1.msra.mxu0 %v1234
        %1263 = vmatprep.subr.mxu0 0.0
        %1264 = vmatpush1.msra.mxu0 %v1235
        %1265 = vmatprep.subr.mxu0 0.0
        %1266 = vmatpush1.msra.mxu0 %v1236
        %1267 = vmatprep.subr.mxu0 0.0
        %1268 = vmatpush1.msra.mxu0 %v1237
        %1269 = vmatprep.subr.mxu0 0.0
        %1270 = vmatpush1.msra.mxu0 %v1238
        %1271 = vmatprep.subr.mxu0 0.0
        %1272 = vmatpush1.msra.mxu0 %v1239
        %1273 = vmatprep.subr.mxu0 0.0
        %1274 = vmatpush1.msra.mxu0 %v1240
        %1275 = vmatprep.subr.mxu0 0.0
        %1276 = vmatpush1.msra.mxu0 %v1241
        %1277 = vmatprep.subr.mxu0 0.0
        %1278 = vmatpush1.msra.mxu0 %v1242
        %1279 = vmatprep.subr.mxu0 0.0
        %1280 = vmatpush1.msra.mxu0 %v1243
        %1281 = vmatprep.subr.mxu0 0.0
        %1282 = vmatpush1.msra.mxu0 %v1244
        %1283 = vmatprep.subr.mxu0 0.0
        %1284 = vmatpush1.msra.mxu0 %v1245
        %1285 = vmatprep.subr.mxu0 0.0
        %1286 = vmatpush1.msra.mxu0 0.0
        %1287 = vmatprep.subr.mxu0 0.0
        %1288 = vmatpush1.msra.mxu0 0.0
        %1289 = vmatprep.subr.mxu0 0.0
        %1290 = vmatpush1.msra.mxu0 0.0
        %1291 = vmatprep.subr.mxu0 0.0
        %1292 = vmatpush1.msra.mxu0 0.0
        %1293 = vmatprep.subr.mxu0 0.0
        %1294 = vmatpush1.msra.mxu0 0.0
        %1295 = vmatprep.subr.mxu0 0.0
        %1296 = vmatpush1.msra.mxu0 0.0
        %1297 = vmatprep.subr.mxu0 0.0
        %1298 = vmatpush1.msra.mxu0 0.0
        %1299 = vmatprep.subr.mxu0 0.0
        %1300 = vmatpush1.msra.mxu0 0.0
        %1301 = vmatprep.subr.mxu0 0.0
        %1302 = vmatpush1.msra.mxu0 0.0
        %1303 = vmatprep.subr.mxu0 0.0
        %1304 = vmatpush1.msra.mxu0 0.0
        %1305 = vmatprep.subr.mxu0 0.0
        %1306 = vmatpush1.msra.mxu0 0.0
        %1307 = vmatprep.subr.mxu0 0.0
        %1308 = vmatpush1.msra.mxu0 0.0
        %1309 = vmatprep.subr.mxu0 0.0
        %1310 = vmatpush1.msra.mxu0 0.0
        %1311 = vmatprep.subr.mxu0 0.0
        %1312 = vmatpush1.msra.mxu0 0.0
        %1313 = vmatprep.subr.mxu0 0.0
        %1314 = vmatpush1.msra.mxu0 0.0
        %1315 = vmatprep.subr.mxu0 0.0
        %1316 = vmatpush1.msra.mxu0 0.0
        %1317 = vmatprep.mubr.f32.mxu0 0.0
        %1318 = vmatmul.mubr.f32.gmra.mrb[0].mxu0 %v1214
        %v1319 = vpop.f32.mrb[0].mxu0
        %v1320 = vadd.f32 %v1251, %v1319
        %v1321 = vpop.f32.mrb[0].mxu0
        %1322 = vmatprep.mubr.f32.mxu0 0.0
        %1323 = vmatmul.mubr.f32.gmra.mrb[0].mxu0 %v1215
        %v1324 = vpop.f32.mrb[0].mxu0
        %v1325 = vadd.f32 %v1251, %v1324
        %v1326 = vpop.f32.mrb[0].mxu0
        %1327 = vmatprep.mubr.f32.mxu0 0.0
        %1328 = vmatmul.mubr.f32.gmra.mrb[0].mxu0 %v1216
        %v1329 = vpop.f32.mrb[0].mxu0
        %v1330 = vadd.f32 %v1251, %v1329
        %v1331 = vpop.f32.mrb[0].mxu0
        %1332 = vmatprep.mubr.f32.mxu0 0.0
        %1333 = vmatmul.mubr.f32.gmra.mrb[0].mxu0 %v1217
        %v1334 = vpop.f32.mrb[0].mxu0
        %v1335 = vadd.f32 %v1251, %v1334
        %v1336 = vpop.f32.mrb[0].mxu0
        %1337 = vmatprep.mubr.f32.mxu0 0.0
        %1338 = vmatmul.mubr.f32.gmra.mrb[0].mxu0 %v1218
        %v1339 = vpop.f32.mrb[0].mxu0
        %v1340 = vadd.f32 %v1251, %v1339
        %v1341 = vpop.f32.mrb[0].mxu0
        %1342 = vmatprep.mubr.f32.mxu0 0.0
        %1343 = vmatmul.mubr.f32.gmra.mrb[0].mxu0 %v1219
        %v1344 = vpop.f32.mrb[0].mxu0
        %v1345 = vadd.f32 %v1251, %v1344
        %v1346 = vpop.f32.mrb[0].mxu0
        %1347 = vmatprep.mubr.f32.mxu0 0.0
        %1348 = vmatmul.mubr.f32.gmra.mrb[0].mxu0 %v1220
        %v1349 = vpop.f32.mrb[0].mxu0
        %v1350 = vadd.f32 %v1251, %v1349
        %v1351 = vpop.f32.mrb[0].mxu0
        %1352 = vmatprep.mubr.f32.mxu0 0.0
        %1353 = vmatmul.mubr.f32.gmra.mrb[0].mxu0 %v1221
        %v1354 = vpop.f32.mrb[0].mxu0
        %v1355 = vadd.f32 %v1251, %v1354
        %v1356 = vpop.f32.mrb[0].mxu0
        %1357 = vmatprep.mubr.f32.mxu0 0.0
        %1358 = vmatmul.mubr.f32.gmra.mrb[0].mxu0 %v1222
        %v1359 = vpop.f32.mrb[0].mxu0
        %v1360 = vadd.f32 %v1251, %v1359
        %v1361 = vpop.f32.mrb[0].mxu0
        %1362 = vmatprep.mubr.f32.mxu0 0.0
        %1363 = vmatmul.mubr.f32.gmra.mrb[0].mxu0 %v1223
        %v1364 = vpop.f32.mrb[0].mxu0
        %v1365 = vadd.f32 %v1251, %v1364
        %v1366 = vpop.f32.mrb[0].mxu0
        %1367 = vmatprep.mubr.f32.mxu0 0.0
        %1368 = vmatmul.mubr.f32.gmra.mrb[0].mxu0 %v1224
        %v1369 = vpop.f32.mrb[0].mxu0
        %v1370 = vadd.f32 %v1251, %v1369
        %v1371 = vpop.f32.mrb[0].mxu0
        %1372 = vmatprep.mubr.f32.mxu0 0.0
        %1373 = vmatmul.mubr.f32.gmra.mrb[0].mxu0 %v1225
        %v1374 = vpop.f32.mrb[0].mxu0
        %v1375 = vadd.f32 %v1251, %v1374
        %v1376 = vpop.f32.mrb[0].mxu0
        %1377 = vmatprep.mubr.f32.mxu0 0.0
        %1378 = vmatmul.mubr.f32.gmra.mrb[0].mxu0 %v1226
        %v1379 = vpop.f32.mrb[0].mxu0
        %v1380 = vadd.f32 %v1251, %v1379
        %v1381 = vpop.f32.mrb[0].mxu0
        %1382 = vmatprep.mubr.f32.mxu0 0.0
        %1383 = vmatmul.mubr.f32.gmra.mrb[0].mxu0 %v1227
        %v1384 = vpop.f32.mrb[0].mxu0
        %v1385 = vadd.f32 %v1251, %v1384
        %v1386 = vpop.f32.mrb[0].mxu0
        %1387 = vmatprep.mubr.f32.mxu0 0.0
        %1388 = vmatmul.mubr.f32.gmra.mrb[0].mxu0 %v1228
        %v1389 = vpop.f32.mrb[0].mxu0
        %v1390 = vadd.f32 %v1251, %v1389
        %v1391 = vpop.f32.mrb[0].mxu0
        %1392 = vmatprep.mubr.f32.mxu0 0.0
        %1393 = vmatmul.mubr.f32.gmra.mrb[0].mxu0 %v1229
        %v1394 = vpop.f32.mrb[0].mxu0
        %v1395 = vadd.f32 %v1251, %v1394
        %v1396 = vpop.f32.mrb[0].mxu0
        %1397 = vdwg.mxu0
        %v1398 = vmax.f32 %v1320, 0.0
        %v1399 = vmax.f32 %v1325, 0.0
        %v1400 = vmax.f32 %v1330, 0.0
        %v1401 = vmax.f32 %v1335, 0.0
        %v1402 = vmax.f32 %v1340, 0.0
        %v1403 = vmax.f32 %v1345, 0.0
        %v1404 = vmax.f32 %v1350, 0.0
        %v1405 = vmax.f32 %v1355, 0.0
        %v1406 = vmax.f32 %v1360, 0.0
        %v1407 = vmax.f32 %v1365, 0.0
        %v1408 = vmax.f32 %v1370, 0.0
        %v1409 = vmax.f32 %v1375, 0.0
        %v1410 = vmax.f32 %v1380, 0.0
        %v1411 = vmax.f32 %v1385, 0.0
        %v1412 = vmax.f32 %v1390, 0.0
        %v1413 = vmax.f32 %v1395, 0.0
        %1414 = vst [vmem:[%s658] sm:$0xff] %v1398
        %1415 = vst [vmem:[%s658 + $0x8] sm:$0xff] %v1399
        %1416 = vst [vmem:[%s658 + $0x10] sm:$0xff] %v1400
        %1417 = vst [vmem:[%s658 + $0x18] sm:$0xff] %v1401
        %1418 = vst [vmem:[%s658 + $0x20] sm:$0xff] %v1402
        %1419 = vst [vmem:[%s658 + $0x28] sm:$0xff] %v1403
        %1420 = vst [vmem:[%s658 + $0x30] sm:$0xff] %v1404
        %1421 = vst [vmem:[%s658 + $0x38] sm:$0xff] %v1405
        %1422 = vst [vmem:[%s658 + $0x40] sm:$0xff] %v1406
        %1423 = vst [vmem:[%s658 + $0x48] sm:$0xff] %v1407
        %1424 = vst [vmem:[%s658 + $0x50] sm:$0xff] %v1408
        %1425 = vst [vmem:[%s658 + $0x58] sm:$0xff] %v1409
        %1426 = vst [vmem:[%s658 + $0x60] sm:$0xff] %v1410
        %1427 = vst [vmem:[%s658 + $0x68] sm:$0xff] %v1411
        %1428 = vst [vmem:[%s658 + $0x70] sm:$0xff] %v1412
        %1429 = vst [vmem:[%s658 + $0x78] sm:$0xff] %v1413
        %v1430 = vld [vmem:[#allocation17] sm:$0xff]
        %v1431 = vld [vmem:[#allocation17 + $0x8] sm:$0xff]
        %v1432 = vld [vmem:[#allocation17 + $0x10] sm:$0xff]
        %v1433 = vld [vmem:[#allocation17 + $0x18] sm:$0xff]
        %v1434 = vld [vmem:[#allocation17 + $0x20] sm:$0xff]
        %v1435 = vld [vmem:[#allocation17 + $0x28] sm:$0xff]
        %v1436 = vld [vmem:[#allocation17 + $0x30] sm:$0xff]
        %v1437 = vld [vmem:[#allocation17 + $0x38] sm:$0xff]
        %v1438 = vld [vmem:[#allocation17 + $0x40] sm:$0xff]
        %v1439 = vld [vmem:[#allocation17 + $0x48] sm:$0xff]
        %v1440 = vld [vmem:[#allocation17 + $0x50] sm:$0xff]
        %v1441 = vld [vmem:[#allocation17 + $0x58] sm:$0xff]
        %v1442 = vld [vmem:[#allocation17 + $0x60] sm:$0xff]
        %v1443 = vld [vmem:[#allocation17 + $0x68] sm:$0xff]
        %v1444 = vld [vmem:[#allocation17 + $0x70] sm:$0xff]
        %v1445 = vld [vmem:[#allocation17 + $0x78] sm:$0xff]
        %v1446 = vld [vmem:[#allocation19] sm:$0x1]
        %v1448 = vlaneseq
        %v1449 = vshrl.u32 %v1448, 7
        %v1450 = vsub.s32 0, %v1449
        %v1451 = vrot.slane %v1446, %v1450
        %1453 = vmatprep.subr.mxu0 0.0
        %1454 = vmatpush1.msra.mxu0 %v1430
        %1455 = vmatprep.subr.mxu0 0.0
        %1456 = vmatpush1.msra.mxu0 %v1431
        %1457 = vmatprep.subr.mxu0 0.0
        %1458 = vmatpush1.msra.mxu0 %v1432
        %1459 = vmatprep.subr.mxu0 0.0
        %1460 = vmatpush1.msra.mxu0 %v1433
        %1461 = vmatprep.subr.mxu0 0.0
        %1462 = vmatpush1.msra.mxu0 %v1434
        %1463 = vmatprep.subr.mxu0 0.0
        %1464 = vmatpush1.msra.mxu0 %v1435
        %1465 = vmatprep.subr.mxu0 0.0
        %1466 = vmatpush1.msra.mxu0 %v1436
        %1467 = vmatprep.subr.mxu0 0.0
        %1468 = vmatpush1.msra.mxu0 %v1437
        %1469 = vmatprep.subr.mxu0 0.0
        %1470 = vmatpush1.msra.mxu0 %v1438
        %1471 = vmatprep.subr.mxu0 0.0
        %1472 = vmatpush1.msra.mxu0 %v1439
        %1473 = vmatprep.subr.mxu0 0.0
        %1474 = vmatpush1.msra.mxu0 %v1440
        %1475 = vmatprep.subr.mxu0 0.0
        %1476 = vmatpush1.msra.mxu0 %v1441
        %1477 = vmatprep.subr.mxu0 0.0
        %1478 = vmatpush1.msra.mxu0 %v1442
        %1479 = vmatprep.subr.mxu0 0.0
        %1480 = vmatpush1.msra.mxu0 %v1443
        %1481 = vmatprep.subr.mxu0 0.0
        %1482 = vmatpush1.msra.mxu0 %v1444
        %1483 = vmatprep.subr.mxu0 0.0
        %1484 = vmatpush1.msra.mxu0 %v1445
        %1485 = vmatprep.subr.mxu0 0.0
        %1486 = vmatpush1.msra.mxu0 0.0
        %1487 = vmatprep.subr.mxu0 0.0
        %1488 = vmatpush1.msra.mxu0 0.0
        %1489 = vmatprep.subr.mxu0 0.0
        %1490 = vmatpush1.msra.mxu0 0.0
        %1491 = vmatprep.subr.mxu0 0.0
        %1492 = vmatpush1.msra.mxu0 0.0
        %1493 = vmatprep.subr.mxu0 0.0
        %1494 = vmatpush1.msra.mxu0 0.0
        %1495 = vmatprep.subr.mxu0 0.0
        %1496 = vmatpush1.msra.mxu0 0.0
        %1497 = vmatprep.subr.mxu0 0.0
        %1498 = vmatpush1.msra.mxu0 0.0
        %1499 = vmatprep.subr.mxu0 0.0
        %1500 = vmatpush1.msra.mxu0 0.0
        %1501 = vmatprep.subr.mxu0 0.0
        %1502 = vmatpush1.msra.mxu0 0.0
        %1503 = vmatprep.subr.mxu0 0.0
        %1504 = vmatpush1.msra.mxu0 0.0
        %1505 = vmatprep.subr.mxu0 0.0
        %1506 = vmatpush1.msra.mxu0 0.0
        %1507 = vmatprep.subr.mxu0 0.0
        %1508 = vmatpush1.msra.mxu0 0.0
        %1509 = vmatprep.subr.mxu0 0.0
        %1510 = vmatpush1.msra.mxu0 0.0
        %1511 = vmatprep.subr.mxu0 0.0
        %1512 = vmatpush1.msra.mxu0 0.0
        %1513 = vmatprep.subr.mxu0 0.0
        %1514 = vmatpush1.msra.mxu0 0.0
        %1515 = vmatprep.subr.mxu0 0.0
        %1516 = vmatpush1.msra.mxu0 0.0
        %1517 = vmatprep.mubr.f32.mxu0 0.0
        %1518 = vmatmul.mubr.f32.gmra.mrb[0].mxu0 %v1398
        %v1519 = vpop.f32.mrb[0].mxu0
        %v1520 = vadd.f32 %v1451, %v1519
        %v1521 = vpop.f32.mrb[0].mxu0
        %1522 = vmatprep.mubr.f32.mxu0 0.0
        %1523 = vmatmul.mubr.f32.gmra.mrb[0].mxu0 %v1399
        %v1524 = vpop.f32.mrb[0].mxu0
        %v1525 = vadd.f32 %v1451, %v1524
        %v1526 = vpop.f32.mrb[0].mxu0
        %1527 = vmatprep.mubr.f32.mxu0 0.0
        %1528 = vmatmul.mubr.f32.gmra.mrb[0].mxu0 %v1400
        %v1529 = vpop.f32.mrb[0].mxu0
        %v1530 = vadd.f32 %v1451, %v1529
        %v1531 = vpop.f32.mrb[0].mxu0
        %1532 = vmatprep.mubr.f32.mxu0 0.0
        %1533 = vmatmul.mubr.f32.gmra.mrb[0].mxu0 %v1401
        %v1534 = vpop.f32.mrb[0].mxu0
        %v1535 = vadd.f32 %v1451, %v1534
        %v1536 = vpop.f32.mrb[0].mxu0
        %1537 = vmatprep.mubr.f32.mxu0 0.0
        %1538 = vmatmul.mubr.f32.gmra.mrb[0].mxu0 %v1402
        %v1539 = vpop.f32.mrb[0].mxu0
        %v1540 = vadd.f32 %v1451, %v1539
        %v1541 = vpop.f32.mrb[0].mxu0
        %1542 = vmatprep.mubr.f32.mxu0 0.0
        %1543 = vmatmul.mubr.f32.gmra.mrb[0].mxu0 %v1403
        %v1544 = vpop.f32.mrb[0].mxu0
        %v1545 = vadd.f32 %v1451, %v1544
        %v1546 = vpop.f32.mrb[0].mxu0
        %1547 = vmatprep.mubr.f32.mxu0 0.0
        %1548 = vmatmul.mubr.f32.gmra.mrb[0].mxu0 %v1404
        %v1549 = vpop.f32.mrb[0].mxu0
        %v1550 = vadd.f32 %v1451, %v1549
        %v1551 = vpop.f32.mrb[0].mxu0
        %1552 = vmatprep.mubr.f32.mxu0 0.0
        %1553 = vmatmul.mubr.f32.gmra.mrb[0].mxu0 %v1405
        %v1554 = vpop.f32.mrb[0].mxu0
        %v1555 = vadd.f32 %v1451, %v1554
        %v1556 = vpop.f32.mrb[0].mxu0
        %1557 = vmatprep.mubr.f32.mxu0 0.0
        %1558 = vmatmul.mubr.f32.gmra.mrb[0].mxu0 %v1406
        %v1559 = vpop.f32.mrb[0].mxu0
        %v1560 = vadd.f32 %v1451, %v1559
        %v1561 = vpop.f32.mrb[0].mxu0
        %1562 = vmatprep.mubr.f32.mxu0 0.0
        %1563 = vmatmul.mubr.f32.gmra.mrb[0].mxu0 %v1407
        %v1564 = vpop.f32.mrb[0].mxu0
        %v1565 = vadd.f32 %v1451, %v1564
        %v1566 = vpop.f32.mrb[0].mxu0
        %1567 = vmatprep.mubr.f32.mxu0 0.0
        %1568 = vmatmul.mubr.f32.gmra.mrb[0].mxu0 %v1408
        %v1569 = vpop.f32.mrb[0].mxu0
        %v1570 = vadd.f32 %v1451, %v1569
        %v1571 = vpop.f32.mrb[0].mxu0
        %1572 = vmatprep.mubr.f32.mxu0 0.0
        %1573 = vmatmul.mubr.f32.gmra.mrb[0].mxu0 %v1409
        %v1574 = vpop.f32.mrb[0].mxu0
        %v1575 = vadd.f32 %v1451, %v1574
        %v1576 = vpop.f32.mrb[0].mxu0
        %1577 = vmatprep.mubr.f32.mxu0 0.0
        %1578 = vmatmul.mubr.f32.gmra.mrb[0].mxu0 %v1410
        %v1579 = vpop.f32.mrb[0].mxu0
        %v1580 = vadd.f32 %v1451, %v1579
        %v1581 = vpop.f32.mrb[0].mxu0
        %1582 = vmatprep.mubr.f32.mxu0 0.0
        %1583 = vmatmul.mubr.f32.gmra.mrb[0].mxu0 %v1411
        %v1584 = vpop.f32.mrb[0].mxu0
        %v1585 = vadd.f32 %v1451, %v1584
        %v1586 = vpop.f32.mrb[0].mxu0
        %1587 = vmatprep.mubr.f32.mxu0 0.0
        %1588 = vmatmul.mubr.f32.gmra.mrb[0].mxu0 %v1412
        %v1589 = vpop.f32.mrb[0].mxu0
        %v1590 = vadd.f32 %v1451, %v1589
        %v1591 = vpop.f32.mrb[0].mxu0
        %1592 = vmatprep.mubr.f32.mxu0 0.0
        %1593 = vmatmul.mubr.f32.gmra.mrb[0].mxu0 %v1413
        %v1594 = vpop.f32.mrb[0].mxu0
        %v1595 = vadd.f32 %v1451, %v1594
        %v1596 = vpop.f32.mrb[0].mxu0
        %1597 = vdwg.mxu0
        %v1598 = vmax.f32 %v1520, 0.0
        %v1599 = vmax.f32 %v1525, 0.0
        %v1600 = vmax.f32 %v1530, 0.0
        %v1601 = vmax.f32 %v1535, 0.0
        %v1602 = vmax.f32 %v1540, 0.0
        %v1603 = vmax.f32 %v1545, 0.0
        %v1604 = vmax.f32 %v1550, 0.0
        %v1605 = vmax.f32 %v1555, 0.0
        %v1606 = vmax.f32 %v1560, 0.0
        %v1607 = vmax.f32 %v1565, 0.0
        %v1608 = vmax.f32 %v1570, 0.0
        %v1609 = vmax.f32 %v1575, 0.0
        %v1610 = vmax.f32 %v1580, 0.0
        %v1611 = vmax.f32 %v1585, 0.0
        %v1612 = vmax.f32 %v1590, 0.0
        %v1613 = vmax.f32 %v1595, 0.0
        %v1614 = vld [vmem:[#allocation20] sm:$0xff]
        %v1615 = vld [vmem:[#allocation20 + $0x8] sm:$0xff]
        %v1616 = vld [vmem:[#allocation20 + $0x10] sm:$0xff]
        %v1617 = vld [vmem:[#allocation20 + $0x18] sm:$0xff]
        %v1618 = vld [vmem:[#allocation20 + $0x20] sm:$0xff]
        %v1619 = vld [vmem:[#allocation20 + $0x28] sm:$0xff]
        %v1620 = vld [vmem:[#allocation20 + $0x30] sm:$0xff]
        %v1621 = vld [vmem:[#allocation20 + $0x38] sm:$0xff]
        %v1622 = vld [vmem:[#allocation20 + $0x40] sm:$0xff]
        %v1623 = vld [vmem:[#allocation20 + $0x48] sm:$0xff]
        %v1624 = vld [vmem:[#allocation20 + $0x50] sm:$0xff]
        %v1625 = vld [vmem:[#allocation20 + $0x58] sm:$0xff]
        %v1626 = vld [vmem:[#allocation20 + $0x60] sm:$0xff]
        %v1627 = vld [vmem:[#allocation20 + $0x68] sm:$0xff]
        %v1628 = vld [vmem:[#allocation20 + $0x70] sm:$0xff]
        %v1629 = vld [vmem:[#allocation20 + $0x78] sm:$0xff]
        %v1630 = vld [vmem:[#allocation22] sm:$0x1]
        %v1632 = vlaneseq
        %v1633 = vshrl.u32 %v1632, 7
        %v1634 = vsub.s32 0, %v1633
        %v1635 = vrot.slane %v1630, %v1634
        %1637 = vmatprep.subr.mxu0 0.0
        %1638 = vmatpush1.msra.mxu0 %v1614
        %1639 = vmatprep.subr.mxu0 0.0
        %1640 = vmatpush1.msra.mxu0 %v1615
        %1641 = vmatprep.subr.mxu0 0.0
        %1642 = vmatpush1.msra.mxu0 %v1616
        %1643 = vmatprep.subr.mxu0 0.0
        %1644 = vmatpush1.msra.mxu0 %v1617
        %1645 = vmatprep.subr.mxu0 0.0
        %1646 = vmatpush1.msra.mxu0 %v1618
        %1647 = vmatprep.subr.mxu0 0.0
        %1648 = vmatpush1.msra.mxu0 %v1619
        %1649 = vmatprep.subr.mxu0 0.0
        %1650 = vmatpush1.msra.mxu0 %v1620
        %1651 = vmatprep.subr.mxu0 0.0
        %1652 = vmatpush1.msra.mxu0 %v1621
        %1653 = vmatprep.subr.mxu0 0.0
        %1654 = vmatpush1.msra.mxu0 %v1622
        %1655 = vmatprep.subr.mxu0 0.0
        %1656 = vmatpush1.msra.mxu0 %v1623
        %1657 = vmatprep.subr.mxu0 0.0
        %1658 = vmatpush1.msra.mxu0 %v1624
        %1659 = vmatprep.subr.mxu0 0.0
        %1660 = vmatpush1.msra.mxu0 %v1625
        %1661 = vmatprep.subr.mxu0 0.0
        %1662 = vmatpush1.msra.mxu0 %v1626
        %1663 = vmatprep.subr.mxu0 0.0
        %1664 = vmatpush1.msra.mxu0 %v1627
        %1665 = vmatprep.subr.mxu0 0.0
        %1666 = vmatpush1.msra.mxu0 %v1628
        %1667 = vmatprep.subr.mxu0 0.0
        %1668 = vmatpush1.msra.mxu0 %v1629
        %1669 = vmatprep.subr.mxu0 0.0
        %1670 = vmatpush1.msra.mxu0 0.0
        %1671 = vmatprep.subr.mxu0 0.0
        %1672 = vmatpush1.msra.mxu0 0.0
        %1673 = vmatprep.subr.mxu0 0.0
        %1674 = vmatpush1.msra.mxu0 0.0
        %1675 = vmatprep.subr.mxu0 0.0
        %1676 = vmatpush1.msra.mxu0 0.0
        %1677 = vmatprep.subr.mxu0 0.0
        %1678 = vmatpush1.msra.mxu0 0.0
        %1679 = vmatprep.subr.mxu0 0.0
        %1680 = vmatpush1.msra.mxu0 0.0
        %1681 = vmatprep.subr.mxu0 0.0
        %1682 = vmatpush1.msra.mxu0 0.0
        %1683 = vmatprep.subr.mxu0 0.0
        %1684 = vmatpush1.msra.mxu0 0.0
        %1685 = vmatprep.subr.mxu0 0.0
        %1686 = vmatpush1.msra.mxu0 0.0
        %1687 = vmatprep.subr.mxu0 0.0
        %1688 = vmatpush1.msra.mxu0 0.0
        %1689 = vmatprep.subr.mxu0 0.0
        %1690 = vmatpush1.msra.mxu0 0.0
        %1691 = vmatprep.subr.mxu0 0.0
        %1692 = vmatpush1.msra.mxu0 0.0
        %1693 = vmatprep.subr.mxu0 0.0
        %1694 = vmatpush1.msra.mxu0 0.0
        %1695 = vmatprep.subr.mxu0 0.0
        %1696 = vmatpush1.msra.mxu0 0.0
        %1697 = vmatprep.subr.mxu0 0.0
        %1698 = vmatpush1.msra.mxu0 0.0
        %1699 = vmatprep.subr.mxu0 0.0
        %1700 = vmatpush1.msra.mxu0 0.0
        %1701 = vmatprep.mubr.f32.mxu0 0.0
        %1702 = vmatmul.mubr.f32.gmra.mrb[0].mxu0 %v1598
        %v1703 = vpop.f32.mrb[0].mxu0
        %v1704 = vadd.f32 %v1635, %v1703
        %v1705 = vpop.f32.mrb[0].mxu0
        %1706 = vmatprep.mubr.f32.mxu0 0.0
        %1707 = vmatmul.mubr.f32.gmra.mrb[0].mxu0 %v1599
        %v1708 = vpop.f32.mrb[0].mxu0
        %v1709 = vadd.f32 %v1635, %v1708
        %v1710 = vpop.f32.mrb[0].mxu0
        %1711 = vmatprep.mubr.f32.mxu0 0.0
        %1712 = vmatmul.mubr.f32.gmra.mrb[0].mxu0 %v1600
        %v1713 = vpop.f32.mrb[0].mxu0
        %v1714 = vadd.f32 %v1635, %v1713
        %v1715 = vpop.f32.mrb[0].mxu0
        %1716 = vmatprep.mubr.f32.mxu0 0.0
        %1717 = vmatmul.mubr.f32.gmra.mrb[0].mxu0 %v1601
        %v1718 = vpop.f32.mrb[0].mxu0
        %v1719 = vadd.f32 %v1635, %v1718
        %v1720 = vpop.f32.mrb[0].mxu0
        %1721 = vmatprep.mubr.f32.mxu0 0.0
        %1722 = vmatmul.mubr.f32.gmra.mrb[0].mxu0 %v1602
        %v1723 = vpop.f32.mrb[0].mxu0
        %v1724 = vadd.f32 %v1635, %v1723
        %v1725 = vpop.f32.mrb[0].mxu0
        %1726 = vmatprep.mubr.f32.mxu0 0.0
        %1727 = vmatmul.mubr.f32.gmra.mrb[0].mxu0 %v1603
        %v1728 = vpop.f32.mrb[0].mxu0
        %v1729 = vadd.f32 %v1635, %v1728
        %v1730 = vpop.f32.mrb[0].mxu0
        %1731 = vmatprep.mubr.f32.mxu0 0.0
        %1732 = vmatmul.mubr.f32.gmra.mrb[0].mxu0 %v1604
        %v1733 = vpop.f32.mrb[0].mxu0
        %v1734 = vadd.f32 %v1635, %v1733
        %v1735 = vpop.f32.mrb[0].mxu0
        %1736 = vmatprep.mubr.f32.mxu0 0.0
        %1737 = vmatmul.mubr.f32.gmra.mrb[0].mxu0 %v1605
        %v1738 = vpop.f32.mrb[0].mxu0
        %v1739 = vadd.f32 %v1635, %v1738
        %v1740 = vpop.f32.mrb[0].mxu0
        %1741 = vmatprep.mubr.f32.mxu0 0.0
        %1742 = vmatmul.mubr.f32.gmra.mrb[0].mxu0 %v1606
        %v1743 = vpop.f32.mrb[0].mxu0
        %v1744 = vadd.f32 %v1635, %v1743
        %v1745 = vpop.f32.mrb[0].mxu0
        %1746 = vmatprep.mubr.f32.mxu0 0.0
        %1747 = vmatmul.mubr.f32.gmra.mrb[0].mxu0 %v1607
        %v1748 = vpop.f32.mrb[0].mxu0
        %v1749 = vadd.f32 %v1635, %v1748
        %v1750 = vpop.f32.mrb[0].mxu0
        %1751 = vmatprep.mubr.f32.mxu0 0.0
        %1752 = vmatmul.mubr.f32.gmra.mrb[0].mxu0 %v1608
        %v1753 = vpop.f32.mrb[0].mxu0
        %v1754 = vadd.f32 %v1635, %v1753
        %v1755 = vpop.f32.mrb[0].mxu0
        %1756 = vmatprep.mubr.f32.mxu0 0.0
        %1757 = vmatmul.mubr.f32.gmra.mrb[0].mxu0 %v1609
        %v1758 = vpop.f32.mrb[0].mxu0
        %v1759 = vadd.f32 %v1635, %v1758
        %v1760 = vpop.f32.mrb[0].mxu0
        %1761 = vmatprep.mubr.f32.mxu0 0.0
        %1762 = vmatmul.mubr.f32.gmra.mrb[0].mxu0 %v1610
        %v1763 = vpop.f32.mrb[0].mxu0
        %v1764 = vadd.f32 %v1635, %v1763
        %v1765 = vpop.f32.mrb[0].mxu0
        %1766 = vmatprep.mubr.f32.mxu0 0.0
        %1767 = vmatmul.mubr.f32.gmra.mrb[0].mxu0 %v1611
        %v1768 = vpop.f32.mrb[0].mxu0
        %v1769 = vadd.f32 %v1635, %v1768
        %v1770 = vpop.f32.mrb[0].mxu0
        %1771 = vmatprep.mubr.f32.mxu0 0.0
        %1772 = vmatmul.mubr.f32.gmra.mrb[0].mxu0 %v1612
        %v1773 = vpop.f32.mrb[0].mxu0
        %v1774 = vadd.f32 %v1635, %v1773
        %v1775 = vpop.f32.mrb[0].mxu0
        %1776 = vmatprep.mubr.f32.mxu0 0.0
        %1777 = vmatmul.mubr.f32.gmra.mrb[0].mxu0 %v1613
        %v1778 = vpop.f32.mrb[0].mxu0
        %v1779 = vadd.f32 %v1635, %v1778
        %v1780 = vpop.f32.mrb[0].mxu0
        %1781 = vdwg.mxu0
        %1782 = vst [vmem:[%s651] sm:$0xff] %v1704
        %1783 = vst [vmem:[%s651 + $0x8] sm:$0xff] %v1709
        %1784 = vst [vmem:[%s651 + $0x10] sm:$0xff] %v1714
        %1785 = vst [vmem:[%s651 + $0x18] sm:$0xff] %v1719
        %1786 = vst [vmem:[%s651 + $0x20] sm:$0xff] %v1724
        %1787 = vst [vmem:[%s651 + $0x28] sm:$0xff] %v1729
        %1788 = vst [vmem:[%s651 + $0x30] sm:$0xff] %v1734
        %1789 = vst [vmem:[%s651 + $0x38] sm:$0xff] %v1739
        %1790 = vst [vmem:[%s651 + $0x40] sm:$0xff] %v1744
        %1791 = vst [vmem:[%s651 + $0x48] sm:$0xff] %v1749
        %1792 = vst [vmem:[%s651 + $0x50] sm:$0xff] %v1754
        %1793 = vst [vmem:[%s651 + $0x58] sm:$0xff] %v1759
        %1794 = vst [vmem:[%s651 + $0x60] sm:$0xff] %v1764
        %1795 = vst [vmem:[%s651 + $0x68] sm:$0xff] %v1769
        %1796 = vst [vmem:[%s651 + $0x70] sm:$0xff] %v1774
        %1797 = vst [vmem:[%s651 + $0x78] sm:$0xff] %v1779
        %s1798 = sand.u32 %s327, 1
        %s1799 = scalar_lea.sflag [#allocation4], %s1798
        %s1800 = sand.u32 %s327, 1
        %s1801 = smul.addr %s1800, 128
        %s1802 = scalar_lea.vmem [#allocation23], %s1801
        %s1803 = sand.u32 %s353, 1
        %s1804 = scalar_lea.sflag [#allocation25], %s1803
        %s1805 = sand.u32 %s353, 1
        %s1806 = smul.addr %s1805, 128
        %s1807 = scalar_lea.vmem [#allocation24], %s1806
        // Predicated region
        $region125: #{tpu_custom_call.1} parent=71 // pred_check
          %p1808 = pneg %p337
        $region126: #{tpu_custom_call.1} parent=71 // pred_check_branch
          %1810 = sbr.rel (%p1808) target = $region128
        $region127: #{tpu_custom_call.1} parent=71 // pred_region
          %s1811 = smul.u32 16, %s41
          %s1813 = ssub.s32 2048, 2048
          %1814 = vsyncadd %s1799, %s1813
          %s1815 = smul.addr %s1811, 128
          %s1816 = scalar_lea.hbm %s13, %s1815
          %s1817 = sshll.u32 %s1802, 4
          %s1818 = int_to_ptr.vmem [resolvable:$true] %s1817
          %1823 = dma.vmem_to_hbm [thread:$0]  %s1818, 2048, %s1816, %s1799, 128, 128, 8
        $region128: #{tpu_custom_call.1} parent=71 // pred_fallthru
          _
        // Predicated region
        $region129: #{tpu_custom_call.1} parent=71 // pred_check
          %p1824 = pneg %p363
        $region130: #{tpu_custom_call.1} parent=71 // pred_check_branch
          %1826 = sbr.rel (%p1824) target = $region132
        $region131: #{tpu_custom_call.1} parent=71 // pred_region
          %s1827 = smul.u32 16, %s41
          %s1829 = ssub.s32 2048, 2048
          %1830 = vsyncadd %s1804, %s1829
          %s1831 = smul.addr %s1827, 128
          %s1832 = scalar_lea.hbm %s14, %s1831
          %s1833 = sshll.u32 %s1807, 4
          %s1834 = int_to_ptr.vmem [resolvable:$true] %s1833
          %1839 = dma.vmem_to_hbm [thread:$0]  %s1834, 2048, %s1832, %s1804, 128, 128, 8
        $region132: #{tpu_custom_call.1} parent=71 // pred_fallthru
          _
      $region72: #{tpu_custom_call.1} parent=5 // pred_fallthru
        _
      %p1840 = scmp.le.s32.totalorder 2, %s36
      // Predicated region
      $region133: #{tpu_custom_call.1} parent=5 // pred_check
        %p1841 = pneg %p1840
      $region134: #{tpu_custom_call.1} parent=5 // pred_check_branch
        %1843 = sbr.rel (%p1841) target = $region136
      $region135: #{tpu_custom_call.1} parent=5 // pred_region
        %s1844 = ssub.s32 %s36, 2
        // Predicated region
        $region137: #{tpu_custom_call.1} parent=135 // pred_check
          %p1845 = pneg %p343
        $region138: #{tpu_custom_call.1} parent=135 // pred_check_branch
          %1847 = sbr.rel (%p1845) target = $region140
        $region139: #{tpu_custom_call.1} parent=135 // pred_region
          %s1848 = sand.u32 %s328, 1
          %s1849 = scalar_lea.sflag [#allocation4], %s1848
          %s1850 = sand.u32 %s328, 1
          %s1851 = smul.addr %s1850, 128
          %s1852 = scalar_lea.vmem [#allocation23], %s1851
          %1853 = dma.done %s1849, 2048
        $region140: #{tpu_custom_call.1} parent=135 // pred_fallthru
          _
        // Predicated region
        $region141: #{tpu_custom_call.1} parent=135 // pred_check
          %p1854 = pneg %p369
        $region142: #{tpu_custom_call.1} parent=135 // pred_check_branch
          %1856 = sbr.rel (%p1854) target = $region144
        $region143: #{tpu_custom_call.1} parent=135 // pred_region
          %s1857 = sand.u32 %s354, 1
          %s1858 = scalar_lea.sflag [#allocation25], %s1857
          %s1859 = sand.u32 %s354, 1
          %s1860 = smul.addr %s1859, 128
          %s1861 = scalar_lea.vmem [#allocation24], %s1860
          %1862 = dma.done %s1858, 2048
        $region144: #{tpu_custom_call.1} parent=135 // pred_fallthru
          _
      $region136: #{tpu_custom_call.1} parent=5 // pred_fallthru
        _
    $region6: #{tpu_custom_call.1} parent=1 // loop_footer
      %s40 = sadd.s32 1, %s36
    $region7: #{tpu_custom_call.1} parent=1 // loop_footer_branch
      %35 = sbr.rel target = $region3
    $region8: #{tpu_custom_call.1} parent=1 // loop_exit
      _
    %1863 = vsyncpa [#allocation3], 1
    %s1864 = scalar_lea.sflag [#allocation3], 1
    %1865 = vsyncpa %s1864, 1
    %1866 = vsyncpa [#allocation6], 1
    %1867 = vsyncpa [#allocation9], 1
    %1868 = vsyncpa [#allocation12], 1
    %1869 = vsyncpa [#allocation15], 1
    %1870 = vsyncpa [#allocation18], 1
    %1871 = vsyncpa [#allocation21], 1
    %1872 = vsyncpa [#allocation4], 1
    %s1873 = scalar_lea.sflag [#allocation4], 1
    %1874 = vsyncpa %s1873, 1
    %1875 = vsyncpa [#allocation25], 1
    %s1876 = scalar_lea.sflag [#allocation25], 1
    %1877 = vsyncpa %s1876, 1

</llo_original>
